<compile_context>
chip_gen: v5e
topology: v5e:2x2
jax: 0.10.0
libtpu: 0.0.40
codegen_flags: <defaults>
</compile_context>

<pallas_src>
import functools

import jax
import jax.numpy as jnp
import numpy as np
from jax.experimental import pallas as pl
from jax.experimental.pallas import tpu as pltpu


_MAX_UNROLL = 64  # fully unroll the GRU recurrence up to this many steps


# ---------------------------------------------------------------------------
# Fused Pallas kernel: edge MLP + (node_encoder ∘ GRU ∘ gru_expander)
# ---------------------------------------------------------------------------
def encoder_fused_kernel(x_ref, wgi_ref, bgi_ref, whh_ref, bhh_ref,
                         wexp_ref, bexp_ref,
                         e_ref, we1_ref, be1_ref, we2_ref, be2_ref,
                         node_out_ref, edge_out_ref,
                         gi_s):
    """x_ref:    (T*N, 4)    time-major, flattened node features
       wgi_ref:  (4, 3G)     node_encoder folded into GRU input weights (r|z|n)
       bgi_ref:  (1, 3G)     fused input bias
       whh_ref:  (G, 3G)     GRU hidden weights (fused gates)
       bhh_ref:  (1, 3G)     GRU hidden bias
       wexp_ref: (G, H)      gru_expander weight;  bexp_ref: (1, H)
       e_ref:    (E, 1)      edge_attr
       we1/we2:  edge_encoder Linear(1->H) / Linear(H->H) weights
       node_out_ref: (N, H); edge_out_ref: (E, H)
       gi_s:     (T*N, 3G)   lane-packed VMEM scratch for the input-path gates
    """
    # ---- edge path first (independent; hides ahead of the serial recurrence)
    e = e_ref[...]                                        # (E, 1)
    eh = e * we1_ref[...] + be1_ref[...]                  # Linear(1->H) as broadcast
    eh = jnp.where(eh > 0, eh, 0.01 * eh)                 # LeakyReLU(0.01)
    edge_out_ref[...] = (jnp.dot(eh, we2_ref[...],
                                 preferred_element_type=jnp.float32)
                         + be2_ref[...])

    # ---- node path ---------------------------------------------------------
    N, _H = node_out_ref.shape
    TN = x_ref.shape[0]
    T = TN // N
    G = whh_ref.shape[0]

    # One fused input-path matmul for ALL gates and ALL T steps (node_encoder
    # already folded into wgi/bgi) -> single lane-packed scratch store.
    gi_s[...] = (jnp.dot(x_ref[...], wgi_ref[...],
                         preferred_element_type=jnp.float32) + bgi_ref[...])

    # Hoist loop-invariant weights/biases into vregs (no per-step ref reads).
    whh = whh_ref[...]                                    # (G, 3G)
    bhh = bhh_ref[...]                                    # (1, 3G)

    def gate_combine(gi, gh, h):
        # Static lane slices of the fused (N, 3G) gate tiles. Gate order r,z,n.
        r = jax.nn.sigmoid(gi[:, :G] + gh[:, :G])
        z = jax.nn.sigmoid(gi[:, G:2 * G] + gh[:, G:2 * G])
        n = jnp.tanh(gi[:, 2 * G:3 * G] + r * gh[:, 2 * G:3 * G])
        return (1.0 - z) * n + z * h

    h0 = jnp.zeros((N, G), jnp.float32)
    if T <= _MAX_UNROLL:
        # Fully unrolled: static scratch slices, one MXU matmul per step, and
        # cross-step scheduling visibility for the LLO scheduler.
        h = h0
        for t in range(T):
            gi = gi_s[t * N:(t + 1) * N, :]
            gh = jnp.dot(h, whh, preferred_element_type=jnp.float32) + bhh
            h = gate_combine(gi, gh, h)
    else:
        # Long-sequence fallback: rolled loop with partial unroll.
        def gru_step(t, h):
            row = pl.multiple_of(t * N, N)
            gi = gi_s[pl.ds(row, N), :]
            gh = jnp.dot(h, whh, preferred_element_type=jnp.float32) + bhh
            return gate_combine(gi, gh, h)
        h = jax.lax.fori_loop(0, T, gru_step, h0, unroll=8)

    # PyTorch forward chunks seq_len by 4096 and sums the final hidden states;
    # for seq_len <= 4096 (asserted in the wrapper) that is exactly one pass.
    node_out_ref[...] = (jnp.dot(h, wexp_ref[...],
                                 preferred_element_type=jnp.float32)
                         + bexp_ref[...])


# ---------------------------------------------------------------------------
# One-time parameter fusion (outside the per-call path)
# ---------------------------------------------------------------------------
def prepare_params(params):
    # node_encoder is a bare nn.Linear (no activation), so it folds exactly:
    #   gi = (x @ w_ne + b_ne) @ w_ih + b_ih = x @ (w_ne@w_ih) + (b_ne@w_ih + b_ih)
    w_gi = params["w_ne"] @ params["w_ih"]                     # (4, 3G)
    b_gi = params["b_ne"] @ params["w_ih"] + params["b_ih"]    # (1, 3G)
    return {
        "w_gi": w_gi, "b_gi": b_gi,
        "w_hh": params["w_hh"], "b_hh": params["b_hh"],
        "w_exp": params["w_exp"], "b_exp": params["b_exp"],
        "w_e1": params["w_e1"], "b_e1": params["b_e1"],
        "w_e2": params["w_e2"], "b_e2": params["b_e2"],
    }


# ---------------------------------------------------------------------------
# Jitted forward wrapper
# ---------------------------------------------------------------------------
@jax.jit
def encoder_forward(read_data_batched, edge_attr, fused):
    x = jnp.squeeze(read_data_batched, axis=0)             # (N, T, 4)
    N, T, F = x.shape
    G = fused["w_hh"].shape[0]
    H = fused["w_exp"].shape[1]
    E = edge_attr.shape[0]
    assert T <= 4096, "chunk-and-sum GRU path for seq_len > 4096 not implemented"

    x_flat = jnp.transpose(x, (1, 0, 2)).reshape(T * N, F)  # time-major, flat

    # Real (lane-padded) VMEM footprint of the gi scratch.
    rows = pl.cdiv(T * N, 8) * 8
    lanes = pl.cdiv(3 * G, 128) * 128
    scratch_bytes = rows * lanes * 4
    assert scratch_bytes <= 48 * 1024 * 1024, (
        "gi scratch would exceed safe VMEM; tile T with a grid axis")
    vmem_limit = int(min(max(scratch_bytes + (8 << 20), 16 << 20), 64 << 20))

    flops = int(2 * T * N * F * 3 * G          # fused input matmul
                + 2 * T * N * G * 3 * G        # per-step hidden matmul
                + 2 * N * G * H                # gru_expander
                + 2 * E * H + 2 * E * H * H)   # edge MLP
    transcendentals = int(3 * T * N * G)       # 2 sigmoid + 1 tanh per step
    bytes_accessed = int(4 * (T * N * F + N * H + E * H + E
                              + F * 3 * G + G * 3 * G + G * H
                              + H * H + 6 * G + 4 * H))

    vmem = pl.BlockSpec(memory_space=pltpu.MemorySpace.VMEM)

    # All operands are tiny; whole-array VMEM residency, no grid.
    # TODO(synk): if callers batch many independent graphs (or E grows), add a
    # leading "parallel" grid axis so v7x's second TensorCore is used.
    node_hidden, edge_hidden = pl.pallas_call(
        encoder_fused_kernel,
        out_shape=(jax.ShapeDtypeStruct((N, H), jnp.float32),
                   jax.ShapeDtypeStruct((E, H), jnp.float32)),
        in_specs=[vmem] * 12,
        out_specs=(vmem, vmem),
        scratch_shapes=[pltpu.VMEM((T * N, 3 * G), jnp.float32)],
        compiler_params=pltpu.CompilerParams(vmem_limit_bytes=vmem_limit),
        cost_estimate=pl.CostEstimate(flops=flops,
                                      transcendentals=transcendentals,
                                      bytes_accessed=bytes_accessed),
    )(x_flat, fused["w_gi"], fused["b_gi"], fused["w_hh"], fused["b_hh"],
      fused["w_exp"], fused["b_exp"],
      edge_attr, fused["w_e1"], fused["b_e1"], fused["w_e2"], fused["b_e2"])

    # TODO(synk): PyTorch forward calls breakpoint(); no kernel equivalent.
    # TODO(synk): edge_encoder_1 output is computed-then-discarded in the torch
    # forward; intentionally dropped here to avoid wasted MXU/DMA work.
    return node_hidden, edge_hidden


# ---------------------------------------------------------------------------
# Deterministic parameter init (PyTorch-style uniform(-1/sqrt(fan_in), ...))
# ---------------------------------------------------------------------------
def init_params(key, gru_dim=8, hidden_dim=32):
    def uni(k, shape, fan_in):
        bound = 1.0 / np.sqrt(fan_in)
        return jax.random.uniform(k, shape, jnp.float32, -bound, bound)

    ks = jax.random.split(key, 14)
    G, H = gru_dim, hidden_dim
    return {
        # node_encoder: Linear(4 -> G), stored as (in, out)
        "w_ne":  uni(ks[0], (4, G), 4),
        "b_ne":  uni(ks[1], (1, G), 4),
        # GRU(G -> G): gate order (r, z, n), stored as (in, 3G)
        "w_ih":  uni(ks[2], (G, 3 * G), G),
        "b_ih":  uni(ks[3], (1, 3 * G), G),
        "w_hh":  uni(ks[4], (G, 3 * G), G),
        "b_hh":  uni(ks[5], (1, 3 * G), G),
        # gru_expander: Linear(G -> H)
        "w_exp": uni(ks[6], (G, H), G),
        "b_exp": uni(ks[7], (1, H), G),
        # edge_encoder: Linear(1->H) -> LeakyReLU -> Linear(H->H)
        "w_e1":  uni(ks[8], (1, H), 1),
        "b_e1":  uni(ks[9], (1, H), 1),
        "w_e2":  uni(ks[10], (H, H), H),
        "b_e2":  uni(ks[11], (1, H), H),
        # edge_encoder_1: Linear(1->H) (unused downstream; kept for parity)
        "w_enc1": uni(ks[12], (1, H), 1),
        "b_enc1": uni(ks[13], (1, H), 1),
    }


# ---------------------------------------------------------------------------
# Pure-JAX reference (mirrors the torch forward, uses the UNFUSED params)
# ---------------------------------------------------------------------------
def reference_forward(read_data_batched, edge_attr, params):
    G = params["w_ne"].shape[1]
    x = jnp.squeeze(read_data_batched, axis=0)            # (N, T, 4)
    enc = x @ params["w_ne"] + params["b_ne"]             # (N, T, G)
    N, T, _ = enc.shape
    h = jnp.zeros((N, G), jnp.float32)
    for t in range(T):
        gi = enc[:, t, :] @ params["w_ih"] + params["b_ih"]
        gh = h @ params["w_hh"] + params["b_hh"]
        r = jax.nn.sigmoid(gi[:, :G] + gh[:, :G])
        z = jax.nn.sigmoid(gi[:, G:2 * G] + gh[:, G:2 * G])
        n = jnp.tanh(gi[:, 2 * G:] + r * gh[:, 2 * G:])
        h = (1.0 - z) * n + z * h
    node_hidden = h @ params["w_exp"] + params["b_exp"]
    eh = edge_attr @ params["w_e1"] + params["b_e1"]
    eh = jnp.where(eh > 0, eh, 0.01 * eh)
    edge_hidden = eh @ params["w_e2"] + params["b_e2"]
    return node_hidden, edge_hidden


if __name__ == "__main__":
    key = jax.random.PRNGKey(0)
    k_p, k_x, k_e = jax.random.split(key, 3)

    gru_dim, hidden_dim = 8, 32
    num_nodes, seq_len, num_edges = 16, 8, 16

    params = init_params(k_p, gru_dim=gru_dim, hidden_dim=hidden_dim)
    fused = prepare_params(params)                         # one-time fusion
    read_data_batched = jax.random.normal(k_x, (1, num_nodes, seq_len, 4),
                                          jnp.float32)
    edge_attr = jax.random.normal(k_e, (num_edges, 1), jnp.float32)

    node_hidden, edge_hidden = encoder_forward(read_data_batched, edge_attr,
                                               fused)
    node_hidden = jax.block_until_ready(node_hidden)
    edge_hidden = jax.block_until_ready(edge_hidden)

    ref_node, ref_edge = reference_forward(read_data_batched, edge_attr, params)
    np.testing.assert_allclose(np.asarray(node_hidden), np.asarray(ref_node),
                               rtol=1e-4, atol=1e-5)
    np.testing.assert_allclose(np.asarray(edge_hidden), np.asarray(ref_edge),
                               rtol=1e-4, atol=1e-5)

    assert node_hidden.shape == (num_nodes, hidden_dim)
    assert edge_hidden.shape == (num_edges, hidden_dim)
    print("KERNEL_OK")
</pallas_src>

<mosaic_0001>
module attributes {stable_mosaic.version = 11 : i64} {
  func.func @encoder_fused_kernel(%arg0: memref<128x4xf32, #tpu.memory_space<vmem>>, %arg1: memref<4x24xf32, #tpu.memory_space<vmem>>, %arg2: memref<1x24xf32, #tpu.memory_space<vmem>>, %arg3: memref<8x24xf32, #tpu.memory_space<vmem>>, %arg4: memref<1x24xf32, #tpu.memory_space<vmem>>, %arg5: memref<8x32xf32, #tpu.memory_space<vmem>>, %arg6: memref<1x32xf32, #tpu.memory_space<vmem>>, %arg7: memref<16x1xf32, #tpu.memory_space<vmem>>, %arg8: memref<1x32xf32, #tpu.memory_space<vmem>>, %arg9: memref<1x32xf32, #tpu.memory_space<vmem>>, %arg10: memref<32x32xf32, #tpu.memory_space<vmem>>, %arg11: memref<1x32xf32, #tpu.memory_space<vmem>>, %arg12: memref<16x32xf32, #tpu.memory_space<vmem>>, %arg13: memref<16x32xf32, #tpu.memory_space<vmem>>, %arg14: memref<128x24xf32, #tpu.memory_space<vmem>>) attributes {dimension_semantics = [], scalar_prefetch = 0 : i64, scratch_operands = 1 : i64, tpu.core_type = #tpu.core_type<tc>} {
    %c0 = arith.constant 0 : index
    %c0_0 = arith.constant 0 : index
    %0 = vector.load %arg7[%c0, %c0_0] : memref<16x1xf32, #tpu.memory_space<vmem>>, vector<16x1xf32>
    %c0_1 = arith.constant 0 : index
    %c0_2 = arith.constant 0 : index
    %1 = vector.load %arg8[%c0_1, %c0_2] : memref<1x32xf32, #tpu.memory_space<vmem>>, vector<1x32xf32>
    %2 = vector.broadcast %0 : vector<16x1xf32> to vector<16x32xf32>
    %3 = vector.broadcast %1 : vector<1x32xf32> to vector<16x32xf32>
    %4 = arith.mulf %2, %3 : vector<16x32xf32>
    %c0_3 = arith.constant 0 : index
    %c0_4 = arith.constant 0 : index
    %5 = vector.load %arg9[%c0_3, %c0_4] : memref<1x32xf32, #tpu.memory_space<vmem>>, vector<1x32xf32>
    %6 = vector.broadcast %5 : vector<1x32xf32> to vector<16x32xf32>
    %7 = arith.addf %4, %6 : vector<16x32xf32>
    %cst = arith.constant 0.000000e+00 : f32
    %8 = vector.broadcast %cst : f32 to vector<16x32xf32>
    %9 = arith.cmpf ogt, %7, %8 : vector<16x32xf32>
    %cst_5 = arith.constant 0.00999999977 : f32
    %10 = vector.broadcast %cst_5 : f32 to vector<16x32xf32>
    %11 = arith.mulf %10, %7 : vector<16x32xf32>
    %12 = arith.select %9, %7, %11 : vector<16x32xi1>, vector<16x32xf32>
    %c0_6 = arith.constant 0 : index
    %c0_7 = arith.constant 0 : index
    %13 = vector.load %arg10[%c0_6, %c0_7] : memref<32x32xf32, #tpu.memory_space<vmem>>, vector<32x32xf32>
    %cst_8 = arith.constant dense<0.000000e+00> : vector<16x32xf32>
    %14 = tpu.matmul %12, %13, %cst_8 {dimension_numbers = #tpu.dot_dimension_numbers<[1], [0], [0], [1], [0, 0, 1, 1], [], []>} : vector<16x32xf32>, vector<32x32xf32>, vector<16x32xf32> -> vector<16x32xf32>
    %c0_9 = arith.constant 0 : index
    %c0_10 = arith.constant 0 : index
    %15 = vector.load %arg11[%c0_9, %c0_10] : memref<1x32xf32, #tpu.memory_space<vmem>>, vector<1x32xf32>
    %16 = vector.broadcast %15 : vector<1x32xf32> to vector<16x32xf32>
    %17 = arith.addf %14, %16 : vector<16x32xf32>
    %c0_11 = arith.constant 0 : index
    %c0_12 = arith.constant 0 : index
    %18 = vector.load %arg13[%c0_11, %c0_12] : memref<16x32xf32, #tpu.memory_space<vmem>>, vector<16x32xf32>
    tpu.vector_store %arg13[%c0_11, %c0_12], %17 {strides = array<i32>} : memref<16x32xf32, #tpu.memory_space<vmem>>, vector<16x32xf32>,
    %c0_13 = arith.constant 0 : index
    %c0_14 = arith.constant 0 : index
    %19 = vector.load %arg0[%c0_13, %c0_14] : memref<128x4xf32, #tpu.memory_space<vmem>>, vector<128x4xf32>
    %c0_15 = arith.constant 0 : index
    %c0_16 = arith.constant 0 : index
    %20 = vector.load %arg1[%c0_15, %c0_16] : memref<4x24xf32, #tpu.memory_space<vmem>>, vector<4x24xf32>
    %cst_17 = arith.constant dense<0.000000e+00> : vector<128x24xf32>
    %21 = tpu.matmul %19, %20, %cst_17 {dimension_numbers = #tpu.dot_dimension_numbers<[1], [0], [0], [1], [0, 0, 1, 1], [], []>} : vector<128x4xf32>, vector<4x24xf32>, vector<128x24xf32> -> vector<128x24xf32>
    %c0_18 = arith.constant 0 : index
    %c0_19 = arith.constant 0 : index
    %22 = vector.load %arg2[%c0_18, %c0_19] : memref<1x24xf32, #tpu.memory_space<vmem>>, vector<1x24xf32>
    %23 = vector.broadcast %22 : vector<1x24xf32> to vector<128x24xf32>
    %24 = arith.addf %21, %23 : vector<128x24xf32>
    %c0_20 = arith.constant 0 : index
    %c0_21 = arith.constant 0 : index
    %25 = vector.load %arg14[%c0_20, %c0_21] : memref<128x24xf32, #tpu.memory_space<vmem>>, vector<128x24xf32>
    tpu.vector_store %arg14[%c0_20, %c0_21], %24 {strides = array<i32>} : memref<128x24xf32, #tpu.memory_space<vmem>>, vector<128x24xf32>,
    %c0_22 = arith.constant 0 : index
    %c0_23 = arith.constant 0 : index
    %26 = vector.load %arg3[%c0_22, %c0_23] : memref<8x24xf32, #tpu.memory_space<vmem>>, vector<8x24xf32>
    %c0_24 = arith.constant 0 : index
    %c0_25 = arith.constant 0 : index
    %27 = vector.load %arg4[%c0_24, %c0_25] : memref<1x24xf32, #tpu.memory_space<vmem>>, vector<1x24xf32>
    %cst_26 = arith.constant 0.000000e+00 : f32
    %28 = vector.broadcast %cst_26 : f32 to vector<16x8xf32>
    %c0_27 = arith.constant 0 : index
    %c0_28 = arith.constant 0 : index
    %29 = vector.load %arg14[%c0_27, %c0_28] : memref<128x24xf32, #tpu.memory_space<vmem>>, vector<16x24xf32>
    %cst_29 = arith.constant dense<0.000000e+00> : vector<16x24xf32>
    %30 = tpu.matmul %28, %26, %cst_29 {dimension_numbers = #tpu.dot_dimension_numbers<[1], [0], [0], [1], [0, 0, 1, 1], [], []>} : vector<16x8xf32>, vector<8x24xf32>, vector<16x24xf32> -> vector<16x24xf32>
    %31 = vector.broadcast %27 : vector<1x24xf32> to vector<16x24xf32>
    %32 = arith.addf %30, %31 : vector<16x24xf32>
    %33 = vector.extract_strided_slice %29 {offsets = [0, 0], sizes = [16, 8], strides = [1, 1]} : vector<16x24xf32> to vector<16x8xf32>
    %34 = vector.extract_strided_slice %32 {offsets = [0, 0], sizes = [16, 8], strides = [1, 1]} : vector<16x24xf32> to vector<16x8xf32>
    %35 = arith.addf %33, %34 : vector<16x8xf32>
    %36 = arith.negf %35 : vector<16x8xf32>
    %37 = math.exp %36 : vector<16x8xf32>
    %cst_30 = arith.constant 1.000000e+00 : f32
    %38 = vector.broadcast %cst_30 : f32 to vector<16x8xf32>
    %39 = arith.addf %38, %37 : vector<16x8xf32>
    %40 = arith.divf %38, %39 : vector<16x8xf32>
    %41 = vector.extract_strided_slice %29 {offsets = [0, 8], sizes = [16, 8], strides = [1, 1]} : vector<16x24xf32> to vector<16x8xf32>
    %42 = vector.extract_strided_slice %32 {offsets = [0, 8], sizes = [16, 8], strides = [1, 1]} : vector<16x24xf32> to vector<16x8xf32>
    %43 = arith.addf %41, %42 : vector<16x8xf32>
    %44 = arith.negf %43 : vector<16x8xf32>
    %45 = math.exp %44 : vector<16x8xf32>
    %cst_31 = arith.constant 1.000000e+00 : f32
    %46 = vector.broadcast %cst_31 : f32 to vector<16x8xf32>
    %47 = arith.addf %46, %45 : vector<16x8xf32>
    %48 = arith.divf %46, %47 : vector<16x8xf32>
    %49 = vector.extract_strided_slice %29 {offsets = [0, 16], sizes = [16, 8], strides = [1, 1]} : vector<16x24xf32> to vector<16x8xf32>
    %50 = vector.extract_strided_slice %32 {offsets = [0, 16], sizes = [16, 8], strides = [1, 1]} : vector<16x24xf32> to vector<16x8xf32>
    %51 = arith.mulf %40, %50 : vector<16x8xf32>
    %52 = arith.addf %49, %51 : vector<16x8xf32>
    %53 = math.tanh %52 : vector<16x8xf32>
    %cst_32 = arith.constant 1.000000e+00 : f32
    %54 = vector.broadcast %cst_32 : f32 to vector<16x8xf32>
    %55 = arith.subf %54, %48 : vector<16x8xf32>
    %56 = arith.mulf %55, %53 : vector<16x8xf32>
    %57 = arith.mulf %48, %28 : vector<16x8xf32>
    %58 = arith.addf %56, %57 : vector<16x8xf32>
    %c16 = arith.constant 16 : index
    %c0_33 = arith.constant 0 : index
    %59 = vector.load %arg14[%c16, %c0_33] : memref<128x24xf32, #tpu.memory_space<vmem>>, vector<16x24xf32>
    %cst_34 = arith.constant dense<0.000000e+00> : vector<16x24xf32>
    %60 = tpu.matmul %58, %26, %cst_34 {dimension_numbers = #tpu.dot_dimension_numbers<[1], [0], [0], [1], [0, 0, 1, 1], [], []>} : vector<16x8xf32>, vector<8x24xf32>, vector<16x24xf32> -> vector<16x24xf32>
    %61 = vector.broadcast %27 : vector<1x24xf32> to vector<16x24xf32>
    %62 = arith.addf %60, %61 : vector<16x24xf32>
    %63 = vector.extract_strided_slice %59 {offsets = [0, 0], sizes = [16, 8], strides = [1, 1]} : vector<16x24xf32> to vector<16x8xf32>
    %64 = vector.extract_strided_slice %62 {offsets = [0, 0], sizes = [16, 8], strides = [1, 1]} : vector<16x24xf32> to vector<16x8xf32>
    %65 = arith.addf %63, %64 : vector<16x8xf32>
    %66 = arith.negf %65 : vector<16x8xf32>
    %67 = math.exp %66 : vector<16x8xf32>
    %cst_35 = arith.constant 1.000000e+00 : f32
    %68 = vector.broadcast %cst_35 : f32 to vector<16x8xf32>
    %69 = arith.addf %68, %67 : vector<16x8xf32>
    %70 = arith.divf %68, %69 : vector<16x8xf32>
    %71 = vector.extract_strided_slice %59 {offsets = [0, 8], sizes = [16, 8], strides = [1, 1]} : vector<16x24xf32> to vector<16x8xf32>
    %72 = vector.extract_strided_slice %62 {offsets = [0, 8], sizes = [16, 8], strides = [1, 1]} : vector<16x24xf32> to vector<16x8xf32>
    %73 = arith.addf %71, %72 : vector<16x8xf32>
    %74 = arith.negf %73 : vector<16x8xf32>
    %75 = math.exp %74 : vector<16x8xf32>
    %cst_36 = arith.constant 1.000000e+00 : f32
    %76 = vector.broadcast %cst_36 : f32 to vector<16x8xf32>
    %77 = arith.addf %76, %75 : vector<16x8xf32>
    %78 = arith.divf %76, %77 : vector<16x8xf32>
    %79 = vector.extract_strided_slice %59 {offsets = [0, 16], sizes = [16, 8], strides = [1, 1]} : vector<16x24xf32> to vector<16x8xf32>
    %80 = vector.extract_strided_slice %62 {offsets = [0, 16], sizes = [16, 8], strides = [1, 1]} : vector<16x24xf32> to vector<16x8xf32>
    %81 = arith.mulf %70, %80 : vector<16x8xf32>
    %82 = arith.addf %79, %81 : vector<16x8xf32>
    %83 = math.tanh %82 : vector<16x8xf32>
    %cst_37 = arith.constant 1.000000e+00 : f32
    %84 = vector.broadcast %cst_37 : f32 to vector<16x8xf32>
    %85 = arith.subf %84, %78 : vector<16x8xf32>
    %86 = arith.mulf %85, %83 : vector<16x8xf32>
    %87 = arith.mulf %78, %58 : vector<16x8xf32>
    %88 = arith.addf %86, %87 : vector<16x8xf32>
    %c32 = arith.constant 32 : index
    %c0_38 = arith.constant 0 : index
    %89 = vector.load %arg14[%c32, %c0_38] : memref<128x24xf32, #tpu.memory_space<vmem>>, vector<16x24xf32>
    %cst_39 = arith.constant dense<0.000000e+00> : vector<16x24xf32>
    %90 = tpu.matmul %88, %26, %cst_39 {dimension_numbers = #tpu.dot_dimension_numbers<[1], [0], [0], [1], [0, 0, 1, 1], [], []>} : vector<16x8xf32>, vector<8x24xf32>, vector<16x24xf32> -> vector<16x24xf32>
    %91 = vector.broadcast %27 : vector<1x24xf32> to vector<16x24xf32>
    %92 = arith.addf %90, %91 : vector<16x24xf32>
    %93 = vector.extract_strided_slice %89 {offsets = [0, 0], sizes = [16, 8], strides = [1, 1]} : vector<16x24xf32> to vector<16x8xf32>
    %94 = vector.extract_strided_slice %92 {offsets = [0, 0], sizes = [16, 8], strides = [1, 1]} : vector<16x24xf32> to vector<16x8xf32>
    %95 = arith.addf %93, %94 : vector<16x8xf32>
    %96 = arith.negf %95 : vector<16x8xf32>
    %97 = math.exp %96 : vector<16x8xf32>
    %cst_40 = arith.constant 1.000000e+00 : f32
    %98 = vector.broadcast %cst_40 : f32 to vector<16x8xf32>
    %99 = arith.addf %98, %97 : vector<16x8xf32>
    %100 = arith.divf %98, %99 : vector<16x8xf32>
    %101 = vector.extract_strided_slice %89 {offsets = [0, 8], sizes = [16, 8], strides = [1, 1]} : vector<16x24xf32> to vector<16x8xf32>
    %102 = vector.extract_strided_slice %92 {offsets = [0, 8], sizes = [16, 8], strides = [1, 1]} : vector<16x24xf32> to vector<16x8xf32>
    %103 = arith.addf %101, %102 : vector<16x8xf32>
    %104 = arith.negf %103 : vector<16x8xf32>
    %105 = math.exp %104 : vector<16x8xf32>
    %cst_41 = arith.constant 1.000000e+00 : f32
    %106 = vector.broadcast %cst_41 : f32 to vector<16x8xf32>
    %107 = arith.addf %106, %105 : vector<16x8xf32>
    %108 = arith.divf %106, %107 : vector<16x8xf32>
    %109 = vector.extract_strided_slice %89 {offsets = [0, 16], sizes = [16, 8], strides = [1, 1]} : vector<16x24xf32> to vector<16x8xf32>
    %110 = vector.extract_strided_slice %92 {offsets = [0, 16], sizes = [16, 8], strides = [1, 1]} : vector<16x24xf32> to vector<16x8xf32>
    %111 = arith.mulf %100, %110 : vector<16x8xf32>
    %112 = arith.addf %109, %111 : vector<16x8xf32>
    %113 = math.tanh %112 : vector<16x8xf32>
    %cst_42 = arith.constant 1.000000e+00 : f32
    %114 = vector.broadcast %cst_42 : f32 to vector<16x8xf32>
    %115 = arith.subf %114, %108 : vector<16x8xf32>
    %116 = arith.mulf %115, %113 : vector<16x8xf32>
    %117 = arith.mulf %108, %88 : vector<16x8xf32>
    %118 = arith.addf %116, %117 : vector<16x8xf32>
    %c48 = arith.constant 48 : index
    %c0_43 = arith.constant 0 : index
    %119 = vector.load %arg14[%c48, %c0_43] : memref<128x24xf32, #tpu.memory_space<vmem>>, vector<16x24xf32>
    %cst_44 = arith.constant dense<0.000000e+00> : vector<16x24xf32>
    %120 = tpu.matmul %118, %26, %cst_44 {dimension_numbers = #tpu.dot_dimension_numbers<[1], [0], [0], [1], [0, 0, 1, 1], [], []>} : vector<16x8xf32>, vector<8x24xf32>, vector<16x24xf32> -> vector<16x24xf32>
    %121 = vector.broadcast %27 : vector<1x24xf32> to vector<16x24xf32>
    %122 = arith.addf %120, %121 : vector<16x24xf32>
    %123 = vector.extract_strided_slice %119 {offsets = [0, 0], sizes = [16, 8], strides = [1, 1]} : vector<16x24xf32> to vector<16x8xf32>
    %124 = vector.extract_strided_slice %122 {offsets = [0, 0], sizes = [16, 8], strides = [1, 1]} : vector<16x24xf32> to vector<16x8xf32>
    %125 = arith.addf %123, %124 : vector<16x8xf32>
    %126 = arith.negf %125 : vector<16x8xf32>
    %127 = math.exp %126 : vector<16x8xf32>
    %cst_45 = arith.constant 1.000000e+00 : f32
    %128 = vector.broadcast %cst_45 : f32 to vector<16x8xf32>
    %129 = arith.addf %128, %127 : vector<16x8xf32>
    %130 = arith.divf %128, %129 : vector<16x8xf32>
    %131 = vector.extract_strided_slice %119 {offsets = [0, 8], sizes = [16, 8], strides = [1, 1]} : vector<16x24xf32> to vector<16x8xf32>
    %132 = vector.extract_strided_slice %122 {offsets = [0, 8], sizes = [16, 8], strides = [1, 1]} : vector<16x24xf32> to vector<16x8xf32>
    %133 = arith.addf %131, %132 : vector<16x8xf32>
    %134 = arith.negf %133 : vector<16x8xf32>
    %135 = math.exp %134 : vector<16x8xf32>
    %cst_46 = arith.constant 1.000000e+00 : f32
    %136 = vector.broadcast %cst_46 : f32 to vector<16x8xf32>
    %137 = arith.addf %136, %135 : vector<16x8xf32>
    %138 = arith.divf %136, %137 : vector<16x8xf32>
    %139 = vector.extract_strided_slice %119 {offsets = [0, 16], sizes = [16, 8], strides = [1, 1]} : vector<16x24xf32> to vector<16x8xf32>
    %140 = vector.extract_strided_slice %122 {offsets = [0, 16], sizes = [16, 8], strides = [1, 1]} : vector<16x24xf32> to vector<16x8xf32>
    %141 = arith.mulf %130, %140 : vector<16x8xf32>
    %142 = arith.addf %139, %141 : vector<16x8xf32>
    %143 = math.tanh %142 : vector<16x8xf32>
    %cst_47 = arith.constant 1.000000e+00 : f32
    %144 = vector.broadcast %cst_47 : f32 to vector<16x8xf32>
    %145 = arith.subf %144, %138 : vector<16x8xf32>
    %146 = arith.mulf %145, %143 : vector<16x8xf32>
    %147 = arith.mulf %138, %118 : vector<16x8xf32>
    %148 = arith.addf %146, %147 : vector<16x8xf32>
    %c64 = arith.constant 64 : index
    %c0_48 = arith.constant 0 : index
    %149 = vector.load %arg14[%c64, %c0_48] : memref<128x24xf32, #tpu.memory_space<vmem>>, vector<16x24xf32>
    %cst_49 = arith.constant dense<0.000000e+00> : vector<16x24xf32>
    %150 = tpu.matmul %148, %26, %cst_49 {dimension_numbers = #tpu.dot_dimension_numbers<[1], [0], [0], [1], [0, 0, 1, 1], [], []>} : vector<16x8xf32>, vector<8x24xf32>, vector<16x24xf32> -> vector<16x24xf32>
    %151 = vector.broadcast %27 : vector<1x24xf32> to vector<16x24xf32>
    %152 = arith.addf %150, %151 : vector<16x24xf32>
    %153 = vector.extract_strided_slice %149 {offsets = [0, 0], sizes = [16, 8], strides = [1, 1]} : vector<16x24xf32> to vector<16x8xf32>
    %154 = vector.extract_strided_slice %152 {offsets = [0, 0], sizes = [16, 8], strides = [1, 1]} : vector<16x24xf32> to vector<16x8xf32>
    %155 = arith.addf %153, %154 : vector<16x8xf32>
    %156 = arith.negf %155 : vector<16x8xf32>
    %157 = math.exp %156 : vector<16x8xf32>
    %cst_50 = arith.constant 1.000000e+00 : f32
    %158 = vector.broadcast %cst_50 : f32 to vector<16x8xf32>
    %159 = arith.addf %158, %157 : vector<16x8xf32>
    %160 = arith.divf %158, %159 : vector<16x8xf32>
    %161 = vector.extract_strided_slice %149 {offsets = [0, 8], sizes = [16, 8], strides = [1, 1]} : vector<16x24xf32> to vector<16x8xf32>
    %162 = vector.extract_strided_slice %152 {offsets = [0, 8], sizes = [16, 8], strides = [1, 1]} : vector<16x24xf32> to vector<16x8xf32>
    %163 = arith.addf %161, %162 : vector<16x8xf32>
    %164 = arith.negf %163 : vector<16x8xf32>
    %165 = math.exp %164 : vector<16x8xf32>
    %cst_51 = arith.constant 1.000000e+00 : f32
    %166 = vector.broadcast %cst_51 : f32 to vector<16x8xf32>
    %167 = arith.addf %166, %165 : vector<16x8xf32>
    %168 = arith.divf %166, %167 : vector<16x8xf32>
    %169 = vector.extract_strided_slice %149 {offsets = [0, 16], sizes = [16, 8], strides = [1, 1]} : vector<16x24xf32> to vector<16x8xf32>
    %170 = vector.extract_strided_slice %152 {offsets = [0, 16], sizes = [16, 8], strides = [1, 1]} : vector<16x24xf32> to vector<16x8xf32>
    %171 = arith.mulf %160, %170 : vector<16x8xf32>
    %172 = arith.addf %169, %171 : vector<16x8xf32>
    %173 = math.tanh %172 : vector<16x8xf32>
    %cst_52 = arith.constant 1.000000e+00 : f32
    %174 = vector.broadcast %cst_52 : f32 to vector<16x8xf32>
    %175 = arith.subf %174, %168 : vector<16x8xf32>
    %176 = arith.mulf %175, %173 : vector<16x8xf32>
    %177 = arith.mulf %168, %148 : vector<16x8xf32>
    %178 = arith.addf %176, %177 : vector<16x8xf32>
    %c80 = arith.constant 80 : index
    %c0_53 = arith.constant 0 : index
    %179 = vector.load %arg14[%c80, %c0_53] : memref<128x24xf32, #tpu.memory_space<vmem>>, vector<16x24xf32>
    %cst_54 = arith.constant dense<0.000000e+00> : vector<16x24xf32>
    %180 = tpu.matmul %178, %26, %cst_54 {dimension_numbers = #tpu.dot_dimension_numbers<[1], [0], [0], [1], [0, 0, 1, 1], [], []>} : vector<16x8xf32>, vector<8x24xf32>, vector<16x24xf32> -> vector<16x24xf32>
    %181 = vector.broadcast %27 : vector<1x24xf32> to vector<16x24xf32>
    %182 = arith.addf %180, %181 : vector<16x24xf32>
    %183 = vector.extract_strided_slice %179 {offsets = [0, 0], sizes = [16, 8], strides = [1, 1]} : vector<16x24xf32> to vector<16x8xf32>
    %184 = vector.extract_strided_slice %182 {offsets = [0, 0], sizes = [16, 8], strides = [1, 1]} : vector<16x24xf32> to vector<16x8xf32>
    %185 = arith.addf %183, %184 : vector<16x8xf32>
    %186 = arith.negf %185 : vector<16x8xf32>
    %187 = math.exp %186 : vector<16x8xf32>
    %cst_55 = arith.constant 1.000000e+00 : f32
    %188 = vector.broadcast %cst_55 : f32 to vector<16x8xf32>
    %189 = arith.addf %188, %187 : vector<16x8xf32>
    %190 = arith.divf %188, %189 : vector<16x8xf32>
    %191 = vector.extract_strided_slice %179 {offsets = [0, 8], sizes = [16, 8], strides = [1, 1]} : vector<16x24xf32> to vector<16x8xf32>
    %192 = vector.extract_strided_slice %182 {offsets = [0, 8], sizes = [16, 8], strides = [1, 1]} : vector<16x24xf32> to vector<16x8xf32>
    %193 = arith.addf %191, %192 : vector<16x8xf32>
    %194 = arith.negf %193 : vector<16x8xf32>
    %195 = math.exp %194 : vector<16x8xf32>
    %cst_56 = arith.constant 1.000000e+00 : f32
    %196 = vector.broadcast %cst_56 : f32 to vector<16x8xf32>
    %197 = arith.addf %196, %195 : vector<16x8xf32>
    %198 = arith.divf %196, %197 : vector<16x8xf32>
    %199 = vector.extract_strided_slice %179 {offsets = [0, 16], sizes = [16, 8], strides = [1, 1]} : vector<16x24xf32> to vector<16x8xf32>
    %200 = vector.extract_strided_slice %182 {offsets = [0, 16], sizes = [16, 8], strides = [1, 1]} : vector<16x24xf32> to vector<16x8xf32>
    %201 = arith.mulf %190, %200 : vector<16x8xf32>
    %202 = arith.addf %199, %201 : vector<16x8xf32>
    %203 = math.tanh %202 : vector<16x8xf32>
    %cst_57 = arith.constant 1.000000e+00 : f32
    %204 = vector.broadcast %cst_57 : f32 to vector<16x8xf32>
    %205 = arith.subf %204, %198 : vector<16x8xf32>
    %206 = arith.mulf %205, %203 : vector<16x8xf32>
    %207 = arith.mulf %198, %178 : vector<16x8xf32>
    %208 = arith.addf %206, %207 : vector<16x8xf32>
    %c96 = arith.constant 96 : index
    %c0_58 = arith.constant 0 : index
    %209 = vector.load %arg14[%c96, %c0_58] : memref<128x24xf32, #tpu.memory_space<vmem>>, vector<16x24xf32>
    %cst_59 = arith.constant dense<0.000000e+00> : vector<16x24xf32>
    %210 = tpu.matmul %208, %26, %cst_59 {dimension_numbers = #tpu.dot_dimension_numbers<[1], [0], [0], [1], [0, 0, 1, 1], [], []>} : vector<16x8xf32>, vector<8x24xf32>, vector<16x24xf32> -> vector<16x24xf32>
    %211 = vector.broadcast %27 : vector<1x24xf32> to vector<16x24xf32>
    %212 = arith.addf %210, %211 : vector<16x24xf32>
    %213 = vector.extract_strided_slice %209 {offsets = [0, 0], sizes = [16, 8], strides = [1, 1]} : vector<16x24xf32> to vector<16x8xf32>
    %214 = vector.extract_strided_slice %212 {offsets = [0, 0], sizes = [16, 8], strides = [1, 1]} : vector<16x24xf32> to vector<16x8xf32>
    %215 = arith.addf %213, %214 : vector<16x8xf32>
    %216 = arith.negf %215 : vector<16x8xf32>
    %217 = math.exp %216 : vector<16x8xf32>
    %cst_60 = arith.constant 1.000000e+00 : f32
    %218 = vector.broadcast %cst_60 : f32 to vector<16x8xf32>
    %219 = arith.addf %218, %217 : vector<16x8xf32>
    %220 = arith.divf %218, %219 : vector<16x8xf32>
    %221 = vector.extract_strided_slice %209 {offsets = [0, 8], sizes = [16, 8], strides = [1, 1]} : vector<16x24xf32> to vector<16x8xf32>
    %222 = vector.extract_strided_slice %212 {offsets = [0, 8], sizes = [16, 8], strides = [1, 1]} : vector<16x24xf32> to vector<16x8xf32>
    %223 = arith.addf %221, %222 : vector<16x8xf32>
    %224 = arith.negf %223 : vector<16x8xf32>
    %225 = math.exp %224 : vector<16x8xf32>
    %cst_61 = arith.constant 1.000000e+00 : f32
    %226 = vector.broadcast %cst_61 : f32 to vector<16x8xf32>
    %227 = arith.addf %226, %225 : vector<16x8xf32>
    %228 = arith.divf %226, %227 : vector<16x8xf32>
    %229 = vector.extract_strided_slice %209 {offsets = [0, 16], sizes = [16, 8], strides = [1, 1]} : vector<16x24xf32> to vector<16x8xf32>
    %230 = vector.extract_strided_slice %212 {offsets = [0, 16], sizes = [16, 8], strides = [1, 1]} : vector<16x24xf32> to vector<16x8xf32>
    %231 = arith.mulf %220, %230 : vector<16x8xf32>
    %232 = arith.addf %229, %231 : vector<16x8xf32>
    %233 = math.tanh %232 : vector<16x8xf32>
    %cst_62 = arith.constant 1.000000e+00 : f32
    %234 = vector.broadcast %cst_62 : f32 to vector<16x8xf32>
    %235 = arith.subf %234, %228 : vector<16x8xf32>
    %236 = arith.mulf %235, %233 : vector<16x8xf32>
    %237 = arith.mulf %228, %208 : vector<16x8xf32>
    %238 = arith.addf %236, %237 : vector<16x8xf32>
    %c112 = arith.constant 112 : index
    %c0_63 = arith.constant 0 : index
    %239 = vector.load %arg14[%c112, %c0_63] : memref<128x24xf32, #tpu.memory_space<vmem>>, vector<16x24xf32>
    %cst_64 = arith.constant dense<0.000000e+00> : vector<16x24xf32>
    %240 = tpu.matmul %238, %26, %cst_64 {dimension_numbers = #tpu.dot_dimension_numbers<[1], [0], [0], [1], [0, 0, 1, 1], [], []>} : vector<16x8xf32>, vector<8x24xf32>, vector<16x24xf32> -> vector<16x24xf32>
    %241 = vector.broadcast %27 : vector<1x24xf32> to vector<16x24xf32>
    %242 = arith.addf %240, %241 : vector<16x24xf32>
    %243 = vector.extract_strided_slice %239 {offsets = [0, 0], sizes = [16, 8], strides = [1, 1]} : vector<16x24xf32> to vector<16x8xf32>
    %244 = vector.extract_strided_slice %242 {offsets = [0, 0], sizes = [16, 8], strides = [1, 1]} : vector<16x24xf32> to vector<16x8xf32>
    %245 = arith.addf %243, %244 : vector<16x8xf32>
    %246 = arith.negf %245 : vector<16x8xf32>
    %247 = math.exp %246 : vector<16x8xf32>
    %cst_65 = arith.constant 1.000000e+00 : f32
    %248 = vector.broadcast %cst_65 : f32 to vector<16x8xf32>
    %249 = arith.addf %248, %247 : vector<16x8xf32>
    %250 = arith.divf %248, %249 : vector<16x8xf32>
    %251 = vector.extract_strided_slice %239 {offsets = [0, 8], sizes = [16, 8], strides = [1, 1]} : vector<16x24xf32> to vector<16x8xf32>
    %252 = vector.extract_strided_slice %242 {offsets = [0, 8], sizes = [16, 8], strides = [1, 1]} : vector<16x24xf32> to vector<16x8xf32>
    %253 = arith.addf %251, %252 : vector<16x8xf32>
    %254 = arith.negf %253 : vector<16x8xf32>
    %255 = math.exp %254 : vector<16x8xf32>
    %cst_66 = arith.constant 1.000000e+00 : f32
    %256 = vector.broadcast %cst_66 : f32 to vector<16x8xf32>
    %257 = arith.addf %256, %255 : vector<16x8xf32>
    %258 = arith.divf %256, %257 : vector<16x8xf32>
    %259 = vector.extract_strided_slice %239 {offsets = [0, 16], sizes = [16, 8], strides = [1, 1]} : vector<16x24xf32> to vector<16x8xf32>
    %260 = vector.extract_strided_slice %242 {offsets = [0, 16], sizes = [16, 8], strides = [1, 1]} : vector<16x24xf32> to vector<16x8xf32>
    %261 = arith.mulf %250, %260 : vector<16x8xf32>
    %262 = arith.addf %259, %261 : vector<16x8xf32>
    %263 = math.tanh %262 : vector<16x8xf32>
    %cst_67 = arith.constant 1.000000e+00 : f32
    %264 = vector.broadcast %cst_67 : f32 to vector<16x8xf32>
    %265 = arith.subf %264, %258 : vector<16x8xf32>
    %266 = arith.mulf %265, %263 : vector<16x8xf32>
    %267 = arith.mulf %258, %238 : vector<16x8xf32>
    %268 = arith.addf %266, %267 : vector<16x8xf32>
    %c0_68 = arith.constant 0 : index
    %c0_69 = arith.constant 0 : index
    %269 = vector.load %arg5[%c0_68, %c0_69] : memref<8x32xf32, #tpu.memory_space<vmem>>, vector<8x32xf32>
    %cst_70 = arith.constant dense<0.000000e+00> : vector<16x32xf32>
    %270 = tpu.matmul %268, %269, %cst_70 {dimension_numbers = #tpu.dot_dimension_numbers<[1], [0], [0], [1], [0, 0, 1, 1], [], []>} : vector<16x8xf32>, vector<8x32xf32>, vector<16x32xf32> -> vector<16x32xf32>
    %c0_71 = arith.constant 0 : index
    %c0_72 = arith.constant 0 : index
    %271 = vector.load %arg6[%c0_71, %c0_72] : memref<1x32xf32, #tpu.memory_space<vmem>>, vector<1x32xf32>
    %272 = vector.broadcast %271 : vector<1x32xf32> to vector<16x32xf32>
    %273 = arith.addf %270, %272 : vector<16x32xf32>
    %c0_73 = arith.constant 0 : index
    %c0_74 = arith.constant 0 : index
    %274 = vector.load %arg12[%c0_73, %c0_74] : memref<16x32xf32, #tpu.memory_space<vmem>>, vector<16x32xf32>
    tpu.vector_store %arg12[%c0_73, %c0_74], %273 {strides = array<i32>} : memref<16x32xf32, #tpu.memory_space<vmem>>, vector<16x32xf32>,
    return
  }
}

</mosaic_0001>

<llo_original>
// kernel: encoder_forward.1
$region0: #{encoder_forward.1}
  #allocation0 [shape = 'u32[]', space=smem, size = 0x4, offset = 0x4, fixed_abs, tag = 'smem constant byte address 0x4 - core index']
  #allocation1 [shape = 'u32[72,128]{1,0:T(1,128)}', space=vmem, size = 0x9000, scoped, tag = 'internal scratch']
  #allocation2 [shape = 'f32[128,24]{1,0:T(8,128)}', space=vmem, size = 0x10000, scoped, tag = 'scratch operand']
  %s0 = inlined_call_operand.vmem [shape: f32[128,4], index: 0, kind: input, shape index: {}]
  %s1 = inlined_call_operand.vmem [shape: f32[4,24], index: 1, kind: input, shape index: {}]
  %s2 = inlined_call_operand.vmem [shape: f32[1,24], index: 2, kind: input, shape index: {}]
  %s3 = inlined_call_operand.vmem [shape: f32[8,24], index: 3, kind: input, shape index: {}]
  %s4 = inlined_call_operand.vmem [shape: f32[1,24], index: 4, kind: input, shape index: {}]
  %s5 = inlined_call_operand.vmem [shape: f32[8,32], index: 5, kind: input, shape index: {}]
  %s6 = inlined_call_operand.vmem [shape: f32[1,32], index: 6, kind: input, shape index: {}]
  %s7 = inlined_call_operand.vmem [shape: f32[16,1], index: 7, kind: input, shape index: {}]
  %s8 = inlined_call_operand.vmem [shape: f32[1,32], index: 8, kind: input, shape index: {}]
  %s9 = inlined_call_operand.vmem [shape: f32[1,32], index: 9, kind: input, shape index: {}]
  %s10 = inlined_call_operand.vmem [shape: f32[32,32], index: 10, kind: input, shape index: {}]
  %s11 = inlined_call_operand.vmem [shape: f32[1,32], index: 11, kind: input, shape index: {}]
  %s12 = inlined_call_operand.hbm [shape: f32[16,32], index: 12, kind: output, shape index: {0}]
  %s13 = inlined_call_operand.hbm [shape: f32[16,32], index: 13, kind: output, shape index: {1}]
  %14 = xla_tuple %s12, %s13
  %s15 = sld [smem:[#allocation0]]
  $region66: #{encoder_forward.1} parent=0
    _
  %s17 = ssub.s32 1, %s15
  %s18 = scalar_select 0, %s17, %s15
  $region1: #{encoder_forward.1} parent=0
    #allocation3 [shape = 'u8[8192]{0}', space=vmem, size = 0x2000, scoped, tag = 'output window, operand 0, single buffered']
    #allocation4 [shape = 's32[1]{0}', space=sflag, size = 0x4, scoped, tag = 'scoped memory for encoder_forward.1']
    #allocation5 [shape = 'u8[8192]{0}', space=vmem, size = 0x2000, scoped, tag = 'output window, operand 1, single buffered']
    #allocation6 [shape = 's32[1]{0}', space=sflag, size = 0x4, scoped, tag = 'scoped memory for encoder_forward.1']
    %19 = vsyncpa [#allocation4], 0
    %20 = vsyncpa [#allocation6], 0
    // Predicated region
    $region2: #{encoder_forward.1} parent=1 // pred_check
      _
    $region3: #{encoder_forward.1} parent=1 // pred_check_branch
      %22 = sbr.rel (0) target = $region5
    $region4: #{encoder_forward.1} parent=1 // pred_region
      _
    $region5: #{encoder_forward.1} parent=1 // pred_fallthru
      _
    // Predicated region
    $region6: #{encoder_forward.1} parent=1 // pred_check
      _
    $region7: #{encoder_forward.1} parent=1 // pred_check_branch
      %24 = sbr.rel (0) target = $region9
    $region8: #{encoder_forward.1} parent=1 // pred_region
      _
    $region9: #{encoder_forward.1} parent=1 // pred_fallthru
      _
    // Predicated region
    $region10: #{encoder_forward.1} parent=1 // pred_check
      _
    $region11: #{encoder_forward.1} parent=1 // pred_check_branch
      %26 = sbr.rel (0) target = $region13
    $region12: #{encoder_forward.1} parent=1 // pred_region
      _
    $region13: #{encoder_forward.1} parent=1 // pred_fallthru
      _
    // Predicated region
    $region14: #{encoder_forward.1} parent=1 // pred_check
      _
    $region15: #{encoder_forward.1} parent=1 // pred_check_branch
      %28 = sbr.rel (0) target = $region17
    $region16: #{encoder_forward.1} parent=1 // pred_region
      _
    $region17: #{encoder_forward.1} parent=1 // pred_fallthru
      _
    // Predicated region
    $region18: #{encoder_forward.1} parent=1 // pred_check
      _
    $region19: #{encoder_forward.1} parent=1 // pred_check_branch
      %30 = sbr.rel (0) target = $region21
    $region20: #{encoder_forward.1} parent=1 // pred_region
      _
    $region21: #{encoder_forward.1} parent=1 // pred_fallthru
      _
    // Predicated region
    $region22: #{encoder_forward.1} parent=1 // pred_check
      _
    $region23: #{encoder_forward.1} parent=1 // pred_check_branch
      %32 = sbr.rel (0) target = $region25
    $region24: #{encoder_forward.1} parent=1 // pred_region
      _
    $region25: #{encoder_forward.1} parent=1 // pred_fallthru
      _
    // Predicated region
    $region26: #{encoder_forward.1} parent=1 // pred_check
      _
    $region27: #{encoder_forward.1} parent=1 // pred_check_branch
      %34 = sbr.rel (0) target = $region29
    $region28: #{encoder_forward.1} parent=1 // pred_region
      _
    $region29: #{encoder_forward.1} parent=1 // pred_fallthru
      _
    // Predicated region
    $region30: #{encoder_forward.1} parent=1 // pred_check
      _
    $region31: #{encoder_forward.1} parent=1 // pred_check_branch
      %36 = sbr.rel (0) target = $region33
    $region32: #{encoder_forward.1} parent=1 // pred_region
      _
    $region33: #{encoder_forward.1} parent=1 // pred_fallthru
      _
    // Predicated region
    $region34: #{encoder_forward.1} parent=1 // pred_check
      _
    $region35: #{encoder_forward.1} parent=1 // pred_check_branch
      %38 = sbr.rel (0) target = $region37
    $region36: #{encoder_forward.1} parent=1 // pred_region
      _
    $region37: #{encoder_forward.1} parent=1 // pred_fallthru
      _
    // Predicated region
    $region38: #{encoder_forward.1} parent=1 // pred_check
      _
    $region39: #{encoder_forward.1} parent=1 // pred_check_branch
      %40 = sbr.rel (0) target = $region41
    $region40: #{encoder_forward.1} parent=1 // pred_region
      _
    $region41: #{encoder_forward.1} parent=1 // pred_fallthru
      _
    // Predicated region
    $region42: #{encoder_forward.1} parent=1 // pred_check
      _
    $region43: #{encoder_forward.1} parent=1 // pred_check_branch
      %42 = sbr.rel (0) target = $region45
    $region44: #{encoder_forward.1} parent=1 // pred_region
      _
    $region45: #{encoder_forward.1} parent=1 // pred_fallthru
      _
    // Predicated region
    $region46: #{encoder_forward.1} parent=1 // pred_check
      _
    $region47: #{encoder_forward.1} parent=1 // pred_check_branch
      %44 = sbr.rel (0) target = $region49
    $region48: #{encoder_forward.1} parent=1 // pred_region
      _
    $region49: #{encoder_forward.1} parent=1 // pred_fallthru
      _
    %v45 = vld [vmem:[%s7] sm:$0xff]
    %v46 = vld [vmem:[%s7 + $0x8] sm:$0xff]
    %v47 = vld [vmem:[%s8] sm:$0x1]
    %49 = vset.pattern.permute.xlu0 0
    %50 = vperm.xlu0 %49, %v45
    %v51 = vpop.permute.xlu0 %50
    %54 = vset.pattern.permute.xlu0 0
    %55 = vperm.xlu0 %54, %v46
    %v56 = vpop.permute.xlu0 %55
    %v59 = vperm.slane %v47, 0
    %v61 = vmul.f32 %v51, %v59
    %v62 = vmul.f32 %v56, %v59
    %v63 = vld [vmem:[%s9] sm:$0x1]
    %v65 = vperm.slane %v63, 0
    %v67 = vadd.f32 %v61, %v65
    %v68 = vadd.f32 %v62, %v65
    %vm69 = vcmp.gt.f32.partialorder %v67, 0.0
    %vm70 = vcmp.gt.f32.partialorder %v68, 0.0
    %v71 = vmul.f32 %v67, 0.01
    %v72 = vmul.f32 %v68, 0.01
    %v73 = vsel %vm69, %v67, %v71
    %v74 = vsel %vm70, %v68, %v72
    %v75 = vld [vmem:[%s10] sm:$0xff]
    %v76 = vld [vmem:[%s10 + $0x8] sm:$0xff]
    %v77 = vld [vmem:[%s10 + $0x10] sm:$0xff]
    %v78 = vld [vmem:[%s10 + $0x18] sm:$0xff]
    %v79 = vld [vmem:[%s11] sm:$0x1]
    %v81 = vperm.slane %v79, 0
    %vm83 = vcmask 261120
    %v85 = vsel %vm83, %v73, 0
    %v88 = vsel %vm83, %v74, 0
    %90 = vmatpush.msra.mxu0 0.0
    %91 = vmatpush.msra.mxu0 0.0
    %92 = vmatpush.msra.mxu0 0.0
    %93 = vmatpush.msra.mxu0 0.0
    %94 = vmatpush.msra.mxu0 0.0
    %95 = vmatpush.msra.mxu0 0.0
    %96 = vmatpush.msra.mxu0 0.0
    %97 = vmatpush.msra.mxu0 0.0
    %98 = vmatpush.msra.mxu0 0.0
    %99 = vmatpush.msra.mxu0 0.0
    %100 = vmatpush.msra.mxu0 0.0
    %101 = vmatpush.msra.mxu0 0.0
    %102 = vmatpush.msra.mxu0 %v78
    %103 = vmatpush.msra.mxu0 %v77
    %104 = vmatpush.msra.mxu0 %v76
    %105 = vmatpush.msra.mxu0 %v75
    %106 = vmatmul.f32.gmra.mxu0 %v85
    %v107 = vpop.f32.mrf.mxu0
    %v108 = vadd.f32 %v81, %v107
    %109 = vmatmul.f32.gmra.mxu0 %v88
    %v110 = vpop.f32.mrf.mxu0
    %v111 = vadd.f32 %v81, %v110
    %112 = vdwg.mxu0
    %113 = vst.msk [vmem:[#allocation5] sm:$0xff] %vm83, %v108
    %114 = vst.msk [vmem:[#allocation5 + $0x8] sm:$0xff] %vm83, %v111
    %v115 = vld [vmem:[%s0] sm:$0xff]
    %v116 = vld [vmem:[%s0 + $0x8] sm:$0xff]
    %v117 = vld [vmem:[%s0 + $0x10] sm:$0xff]
    %v118 = vld [vmem:[%s0 + $0x18] sm:$0xff]
    %v119 = vld [vmem:[%s0 + $0x20] sm:$0xff]
    %v120 = vld [vmem:[%s0 + $0x28] sm:$0xff]
    %v121 = vld [vmem:[%s0 + $0x30] sm:$0xff]
    %v122 = vld [vmem:[%s0 + $0x38] sm:$0xff]
    %v123 = vld [vmem:[%s0 + $0x40] sm:$0xff]
    %v124 = vld [vmem:[%s0 + $0x48] sm:$0xff]
    %v125 = vld [vmem:[%s0 + $0x50] sm:$0xff]
    %v126 = vld [vmem:[%s0 + $0x58] sm:$0xff]
    %v127 = vld [vmem:[%s0 + $0x60] sm:$0xff]
    %v128 = vld [vmem:[%s0 + $0x68] sm:$0xff]
    %v129 = vld [vmem:[%s0 + $0x70] sm:$0xff]
    %v130 = vld [vmem:[%s0 + $0x78] sm:$0xff]
    %v131 = vld [vmem:[%s1] sm:$0xf]
    %v132 = vld [vmem:[%s2] sm:$0x1]
    %v134 = vperm.slane %v132, 0
    %vm136 = vcmask 31744
    %v138 = vsel %vm136, %v115, 0
    %v141 = vsel %vm136, %v116, 0
    %v144 = vsel %vm136, %v117, 0
    %v147 = vsel %vm136, %v118, 0
    %v150 = vsel %vm136, %v119, 0
    %v153 = vsel %vm136, %v120, 0
    %v156 = vsel %vm136, %v121, 0
    %v159 = vsel %vm136, %v122, 0
    %v162 = vsel %vm136, %v123, 0
    %v165 = vsel %vm136, %v124, 0
    %v168 = vsel %vm136, %v125, 0
    %v171 = vsel %vm136, %v126, 0
    %v174 = vsel %vm136, %v127, 0
    %v177 = vsel %vm136, %v128, 0
    %v180 = vsel %vm136, %v129, 0
    %v183 = vsel %vm136, %v130, 0
    %vm185 = vcmask 1043456
    %v187 = vsel %vm185, %v131, 0
    %189 = vmatpush.msra.mxu0 0.0
    %190 = vmatpush.msra.mxu0 0.0
    %191 = vmatpush.msra.mxu0 0.0
    %192 = vmatpush.msra.mxu0 0.0
    %193 = vmatpush.msra.mxu0 0.0
    %194 = vmatpush.msra.mxu0 0.0
    %195 = vmatpush.msra.mxu0 0.0
    %196 = vmatpush.msra.mxu0 0.0
    %197 = vmatpush.msra.mxu0 0.0
    %198 = vmatpush.msra.mxu0 0.0
    %199 = vmatpush.msra.mxu0 0.0
    %200 = vmatpush.msra.mxu0 0.0
    %201 = vmatpush.msra.mxu0 0.0
    %202 = vmatpush.msra.mxu0 0.0
    %203 = vmatpush.msra.mxu0 0.0
    %204 = vmatpush.msra.mxu0 %v187
    %205 = vmatmul.f32.gmra.mxu0 %v138
    %v206 = vpop.f32.mrf.mxu0
    %v207 = vadd.f32 %v134, %v206
    %208 = vmatmul.f32.gmra.mxu0 %v141
    %v209 = vpop.f32.mrf.mxu0
    %v210 = vadd.f32 %v134, %v209
    %211 = vmatmul.f32.gmra.mxu0 %v144
    %v212 = vpop.f32.mrf.mxu0
    %v213 = vadd.f32 %v134, %v212
    %214 = vmatmul.f32.gmra.mxu0 %v147
    %v215 = vpop.f32.mrf.mxu0
    %v216 = vadd.f32 %v134, %v215
    %217 = vmatmul.f32.gmra.mxu0 %v150
    %v218 = vpop.f32.mrf.mxu0
    %v219 = vadd.f32 %v134, %v218
    %220 = vmatmul.f32.gmra.mxu0 %v153
    %v221 = vpop.f32.mrf.mxu0
    %v222 = vadd.f32 %v134, %v221
    %223 = vmatmul.f32.gmra.mxu0 %v156
    %v224 = vpop.f32.mrf.mxu0
    %v225 = vadd.f32 %v134, %v224
    %226 = vmatmul.f32.gmra.mxu0 %v159
    %v227 = vpop.f32.mrf.mxu0
    %v228 = vadd.f32 %v134, %v227
    %229 = vmatmul.f32.gmra.mxu0 %v162
    %v230 = vpop.f32.mrf.mxu0
    %v231 = vadd.f32 %v134, %v230
    %232 = vmatmul.f32.gmra.mxu0 %v165
    %v233 = vpop.f32.mrf.mxu0
    %v234 = vadd.f32 %v134, %v233
    %235 = vmatmul.f32.gmra.mxu0 %v168
    %v236 = vpop.f32.mrf.mxu0
    %v237 = vadd.f32 %v134, %v236
    %238 = vmatmul.f32.gmra.mxu0 %v171
    %v239 = vpop.f32.mrf.mxu0
    %v240 = vadd.f32 %v134, %v239
    %241 = vmatmul.f32.gmra.mxu0 %v174
    %v242 = vpop.f32.mrf.mxu0
    %v243 = vadd.f32 %v134, %v242
    %244 = vmatmul.f32.gmra.mxu0 %v177
    %v245 = vpop.f32.mrf.mxu0
    %v246 = vadd.f32 %v134, %v245
    %247 = vmatmul.f32.gmra.mxu0 %v180
    %v248 = vpop.f32.mrf.mxu0
    %v249 = vadd.f32 %v134, %v248
    %250 = vmatmul.f32.gmra.mxu0 %v183
    %v251 = vpop.f32.mrf.mxu0
    %v252 = vadd.f32 %v134, %v251
    %253 = vdwg.mxu0
    %vm254 = vcmask 195584
    %255 = vst.msk [vmem:[#allocation2] sm:$0xff] %vm254, %v207
    %256 = vst.msk [vmem:[#allocation2 + $0x8] sm:$0xff] %vm254, %v210
    %257 = vst.msk [vmem:[#allocation2 + $0x10] sm:$0xff] %vm254, %v213
    %258 = vst.msk [vmem:[#allocation2 + $0x18] sm:$0xff] %vm254, %v216
    %259 = vst.msk [vmem:[#allocation2 + $0x20] sm:$0xff] %vm254, %v219
    %260 = vst.msk [vmem:[#allocation2 + $0x28] sm:$0xff] %vm254, %v222
    %261 = vst.msk [vmem:[#allocation2 + $0x30] sm:$0xff] %vm254, %v225
    %262 = vst.msk [vmem:[#allocation2 + $0x38] sm:$0xff] %vm254, %v228
    %263 = vst.msk [vmem:[#allocation2 + $0x40] sm:$0xff] %vm254, %v231
    %264 = vst.msk [vmem:[#allocation2 + $0x48] sm:$0xff] %vm254, %v234
    %265 = vst.msk [vmem:[#allocation2 + $0x50] sm:$0xff] %vm254, %v237
    %266 = vst.msk [vmem:[#allocation2 + $0x58] sm:$0xff] %vm254, %v240
    %267 = vst.msk [vmem:[#allocation2 + $0x60] sm:$0xff] %vm254, %v243
    %268 = vst.msk [vmem:[#allocation2 + $0x68] sm:$0xff] %vm254, %v246
    %269 = vst.msk [vmem:[#allocation2 + $0x70] sm:$0xff] %vm254, %v249
    %270 = vst.msk [vmem:[#allocation2 + $0x78] sm:$0xff] %vm254, %v252
    %v271 = vld [vmem:[%s3] sm:$0xff]
    %v272 = vld [vmem:[%s4] sm:$0x1]
    %v273 = vld [vmem:[#allocation2] sm:$0xff]
    %v274 = vld [vmem:[#allocation2 + $0x8] sm:$0xff]
    %v276 = vperm.slane %v272, 0
    %vm278 = vcmask 64512
    %v280 = vsel %vm278, 0.0, 0
    %282 = vmatpush.msra.mxu0 0.0
    %283 = vmatpush.msra.mxu0 0.0
    %284 = vmatpush.msra.mxu0 0.0
    %285 = vmatpush.msra.mxu0 0.0
    %286 = vmatpush.msra.mxu0 0.0
    %287 = vmatpush.msra.mxu0 0.0
    %288 = vmatpush.msra.mxu0 0.0
    %289 = vmatpush.msra.mxu0 0.0
    %290 = vmatpush.msra.mxu0 0.0
    %291 = vmatpush.msra.mxu0 0.0
    %292 = vmatpush.msra.mxu0 0.0
    %293 = vmatpush.msra.mxu0 0.0
    %294 = vmatpush.msra.mxu0 0.0
    %295 = vmatpush.msra.mxu0 0.0
    %296 = vmatpush.msra.mxu0 0.0
    %297 = vmatpush.msra.mxu0 %v271
    %298 = vmatmul.f32.gmra.mxu0 %v280
    %v299 = vpop.f32.mrf.mxu0
    %v300 = vadd.f32 %v276, %v299
    %301 = vmatmul.f32.gmra.mxu0 %v280
    %v302 = vpop.f32.mrf.mxu0
    %v303 = vadd.f32 %v276, %v302
    %304 = vdwg.mxu0
    %v305 = vadd.f32 %v273, %v300
    %v306 = vadd.f32 %v274, %v303
    %v307 = vxor.u32 %v305, 2147483648
    %v308 = vxor.u32 %v306, 2147483648
    %v309 = vmul.f32 %v307, 1.442695
    %v310 = vpow.pop %v309
    %v311 = vmul.f32 %v308, 1.442695
    %v312 = vpow.pop %v311
    %v313 = vadd.f32 %v310, 1.0
    %v314 = vadd.f32 %v312, 1.0
    %v315 = vrcp.pop %v313
    %v316 = vmul.f32 %v313, %v315
    %v317 = vsub.f32 1.0, %v316
    %v318 = vmul.f32 %v315, %v317
    %v319 = vadd.f32 %v315, %v318
    %vm320 = vweird.f32 %v313
    %vm321 = vweird.f32 %v315
    %vm322 = vmor %vm320, %vm321
    %v323 = vsel %vm322, %v315, %v319
    %v324 = vand.u32 2147483647, %v313
    %vm325 = vcmp.eq.f32.partialorder %v324, 8.507059e+37
    %v326 = vand.u32 %v313, 2147483648
    %v327 = vor.u32 1.1754944e-38, %v326
    %v328 = vsel %vm325, %v327, %v323
    %v329 = vmul.f32 1.0, %v328
    %v330 = vrcp.pop %v314
    %v331 = vmul.f32 %v314, %v330
    %v332 = vsub.f32 1.0, %v331
    %v333 = vmul.f32 %v330, %v332
    %v334 = vadd.f32 %v330, %v333
    %vm335 = vweird.f32 %v314
    %vm336 = vweird.f32 %v330
    %vm337 = vmor %vm335, %vm336
    %v338 = vsel %vm337, %v330, %v334
    %v339 = vand.u32 2147483647, %v314
    %vm340 = vcmp.eq.f32.partialorder %v339, 8.507059e+37
    %v341 = vand.u32 %v314, 2147483648
    %v342 = vor.u32 1.1754944e-38, %v341
    %v343 = vsel %vm340, %v342, %v338
    %v344 = vmul.f32 1.0, %v343
    %347 = vrot.lane.b32.xlu0 %v300, 112
    %v348 = vpop.permute.xlu0 %347
    %349 = vrot.lane.b32.xlu0 %v303, 112
    %v350 = vpop.permute.xlu0 %349
    %v353 = vmul.f32 %v329, %v348
    %v354 = vmul.f32 %v344, %v350
    %357 = vrot.lane.b32.xlu0 %v353, 16
    %v358 = vpop.permute.xlu0 %357
    %359 = vrot.lane.b32.xlu0 %v354, 16
    %v360 = vpop.permute.xlu0 %359
    %v363 = vadd.f32 %v273, %v358
    %v364 = vadd.f32 %v274, %v360
    %v365 = vtanh.pop %v363
    %v366 = vtanh.pop %v364
    %v367 = vsub.f32 1.0, %v329
    %v368 = vsub.f32 1.0, %v344
    %371 = vrot.lane.b32.xlu0 %v365, 120
    %v372 = vpop.permute.xlu0 %371
    %373 = vrot.lane.b32.xlu0 %v366, 120
    %v374 = vpop.permute.xlu0 %373
    %v377 = vmul.f32 %v367, %v372
    %v378 = vmul.f32 %v368, %v374
    %v379 = vmul.f32 %v329, 0.0
    %v380 = vmul.f32 %v344, 0.0
    %v381 = vadd.f32 %v377, %v379
    %v382 = vadd.f32 %v378, %v380
    %v383 = vld [vmem:[#allocation2 + $0x10] sm:$0xff]
    %v384 = vld [vmem:[#allocation2 + $0x18] sm:$0xff]
    %387 = vrot.lane.b32.xlu0 %v381, 120
    %v388 = vpop.permute.xlu0 %387
    %389 = vrot.lane.b32.xlu0 %v382, 120
    %v390 = vpop.permute.xlu0 %389
    %v391 = vsel %vm278, %v388, 0
    %v393 = vsel %vm278, %v390, 0
    %395 = vmatpush.msra.mxu0 0.0
    %396 = vmatpush.msra.mxu0 0.0
    %397 = vmatpush.msra.mxu0 0.0
    %398 = vmatpush.msra.mxu0 0.0
    %399 = vmatpush.msra.mxu0 0.0
    %400 = vmatpush.msra.mxu0 0.0
    %401 = vmatpush.msra.mxu0 0.0
    %402 = vmatpush.msra.mxu0 0.0
    %403 = vmatpush.msra.mxu0 0.0
    %404 = vmatpush.msra.mxu0 0.0
    %405 = vmatpush.msra.mxu0 0.0
    %406 = vmatpush.msra.mxu0 0.0
    %407 = vmatpush.msra.mxu0 0.0
    %408 = vmatpush.msra.mxu0 0.0
    %409 = vmatpush.msra.mxu0 0.0
    %410 = vmatpush.msra.mxu0 %v271
    %411 = vmatmul.f32.gmra.mxu0 %v391
    %v412 = vpop.f32.mrf.mxu0
    %v413 = vadd.f32 %v276, %v412
    %414 = vmatmul.f32.gmra.mxu0 %v393
    %v415 = vpop.f32.mrf.mxu0
    %v416 = vadd.f32 %v276, %v415
    %417 = vdwg.mxu0
    %v418 = vadd.f32 %v383, %v413
    %v419 = vadd.f32 %v384, %v416
    %v420 = vxor.u32 %v418, 2147483648
    %v421 = vxor.u32 %v419, 2147483648
    %v422 = vmul.f32 %v420, 1.442695
    %v423 = vpow.pop %v422
    %v424 = vmul.f32 %v421, 1.442695
    %v425 = vpow.pop %v424
    %v426 = vadd.f32 %v423, 1.0
    %v427 = vadd.f32 %v425, 1.0
    %v428 = vrcp.pop %v426
    %v429 = vmul.f32 %v426, %v428
    %v430 = vsub.f32 1.0, %v429
    %v431 = vmul.f32 %v428, %v430
    %v432 = vadd.f32 %v428, %v431
    %vm433 = vweird.f32 %v426
    %vm434 = vweird.f32 %v428
    %vm435 = vmor %vm433, %vm434
    %v436 = vsel %vm435, %v428, %v432
    %v437 = vand.u32 2147483647, %v426
    %vm438 = vcmp.eq.f32.partialorder %v437, 8.507059e+37
    %v439 = vand.u32 %v426, 2147483648
    %v440 = vor.u32 1.1754944e-38, %v439
    %v441 = vsel %vm438, %v440, %v436
    %v442 = vmul.f32 1.0, %v441
    %v443 = vrcp.pop %v427
    %v444 = vmul.f32 %v427, %v443
    %v445 = vsub.f32 1.0, %v444
    %v446 = vmul.f32 %v443, %v445
    %v447 = vadd.f32 %v443, %v446
    %vm448 = vweird.f32 %v427
    %vm449 = vweird.f32 %v443
    %vm450 = vmor %vm448, %vm449
    %v451 = vsel %vm450, %v443, %v447
    %v452 = vand.u32 2147483647, %v427
    %vm453 = vcmp.eq.f32.partialorder %v452, 8.507059e+37
    %v454 = vand.u32 %v427, 2147483648
    %v455 = vor.u32 1.1754944e-38, %v454
    %v456 = vsel %vm453, %v455, %v451
    %v457 = vmul.f32 1.0, %v456
    %460 = vrot.lane.b32.xlu0 %v413, 112
    %v461 = vpop.permute.xlu0 %460
    %462 = vrot.lane.b32.xlu0 %v416, 112
    %v463 = vpop.permute.xlu0 %462
    %v466 = vmul.f32 %v442, %v461
    %v467 = vmul.f32 %v457, %v463
    %470 = vrot.lane.b32.xlu0 %v466, 16
    %v471 = vpop.permute.xlu0 %470
    %472 = vrot.lane.b32.xlu0 %v467, 16
    %v473 = vpop.permute.xlu0 %472
    %v476 = vadd.f32 %v383, %v471
    %v477 = vadd.f32 %v384, %v473
    %v478 = vtanh.pop %v476
    %v479 = vtanh.pop %v477
    %v480 = vsub.f32 1.0, %v442
    %v481 = vsub.f32 1.0, %v457
    %484 = vrot.lane.b32.xlu0 %v478, 120
    %v485 = vpop.permute.xlu0 %484
    %486 = vrot.lane.b32.xlu0 %v479, 120
    %v487 = vpop.permute.xlu0 %486
    %v490 = vmul.f32 %v480, %v485
    %v491 = vmul.f32 %v481, %v487
    %v492 = vmul.f32 %v442, %v381
    %v493 = vmul.f32 %v457, %v382
    %v494 = vadd.f32 %v490, %v492
    %v495 = vadd.f32 %v491, %v493
    %v496 = vld [vmem:[#allocation2 + $0x20] sm:$0xff]
    %v497 = vld [vmem:[#allocation2 + $0x28] sm:$0xff]
    %500 = vrot.lane.b32.xlu0 %v494, 120
    %v501 = vpop.permute.xlu0 %500
    %502 = vrot.lane.b32.xlu0 %v495, 120
    %v503 = vpop.permute.xlu0 %502
    %v504 = vsel %vm278, %v501, 0
    %v506 = vsel %vm278, %v503, 0
    %508 = vmatpush.msra.mxu0 0.0
    %509 = vmatpush.msra.mxu0 0.0
    %510 = vmatpush.msra.mxu0 0.0
    %511 = vmatpush.msra.mxu0 0.0
    %512 = vmatpush.msra.mxu0 0.0
    %513 = vmatpush.msra.mxu0 0.0
    %514 = vmatpush.msra.mxu0 0.0
    %515 = vmatpush.msra.mxu0 0.0
    %516 = vmatpush.msra.mxu0 0.0
    %517 = vmatpush.msra.mxu0 0.0
    %518 = vmatpush.msra.mxu0 0.0
    %519 = vmatpush.msra.mxu0 0.0
    %520 = vmatpush.msra.mxu0 0.0
    %521 = vmatpush.msra.mxu0 0.0
    %522 = vmatpush.msra.mxu0 0.0
    %523 = vmatpush.msra.mxu0 %v271
    %524 = vmatmul.f32.gmra.mxu0 %v504
    %v525 = vpop.f32.mrf.mxu0
    %v526 = vadd.f32 %v276, %v525
    %527 = vmatmul.f32.gmra.mxu0 %v506
    %v528 = vpop.f32.mrf.mxu0
    %v529 = vadd.f32 %v276, %v528
    %530 = vdwg.mxu0
    %v531 = vadd.f32 %v496, %v526
    %v532 = vadd.f32 %v497, %v529
    %v533 = vxor.u32 %v531, 2147483648
    %v534 = vxor.u32 %v532, 2147483648
    %v535 = vmul.f32 %v533, 1.442695
    %v536 = vpow.pop %v535
    %v537 = vmul.f32 %v534, 1.442695
    %v538 = vpow.pop %v537
    %v539 = vadd.f32 %v536, 1.0
    %v540 = vadd.f32 %v538, 1.0
    %v541 = vrcp.pop %v539
    %v542 = vmul.f32 %v539, %v541
    %v543 = vsub.f32 1.0, %v542
    %v544 = vmul.f32 %v541, %v543
    %v545 = vadd.f32 %v541, %v544
    %vm546 = vweird.f32 %v539
    %vm547 = vweird.f32 %v541
    %vm548 = vmor %vm546, %vm547
    %v549 = vsel %vm548, %v541, %v545
    %v550 = vand.u32 2147483647, %v539
    %vm551 = vcmp.eq.f32.partialorder %v550, 8.507059e+37
    %v552 = vand.u32 %v539, 2147483648
    %v553 = vor.u32 1.1754944e-38, %v552
    %v554 = vsel %vm551, %v553, %v549
    %v555 = vmul.f32 1.0, %v554
    %v556 = vrcp.pop %v540
    %v557 = vmul.f32 %v540, %v556
    %v558 = vsub.f32 1.0, %v557
    %v559 = vmul.f32 %v556, %v558
    %v560 = vadd.f32 %v556, %v559
    %vm561 = vweird.f32 %v540
    %vm562 = vweird.f32 %v556
    %vm563 = vmor %vm561, %vm562
    %v564 = vsel %vm563, %v556, %v560
    %v565 = vand.u32 2147483647, %v540
    %vm566 = vcmp.eq.f32.partialorder %v565, 8.507059e+37
    %v567 = vand.u32 %v540, 2147483648
    %v568 = vor.u32 1.1754944e-38, %v567
    %v569 = vsel %vm566, %v568, %v564
    %v570 = vmul.f32 1.0, %v569
    %573 = vrot.lane.b32.xlu0 %v526, 112
    %v574 = vpop.permute.xlu0 %573
    %575 = vrot.lane.b32.xlu0 %v529, 112
    %v576 = vpop.permute.xlu0 %575
    %v579 = vmul.f32 %v555, %v574
    %v580 = vmul.f32 %v570, %v576
    %583 = vrot.lane.b32.xlu0 %v579, 16
    %v584 = vpop.permute.xlu0 %583
    %585 = vrot.lane.b32.xlu0 %v580, 16
    %v586 = vpop.permute.xlu0 %585
    %v589 = vadd.f32 %v496, %v584
    %v590 = vadd.f32 %v497, %v586
    %v591 = vtanh.pop %v589
    %v592 = vtanh.pop %v590
    %v593 = vsub.f32 1.0, %v555
    %v594 = vsub.f32 1.0, %v570
    %597 = vrot.lane.b32.xlu0 %v591, 120
    %v598 = vpop.permute.xlu0 %597
    %599 = vrot.lane.b32.xlu0 %v592, 120
    %v600 = vpop.permute.xlu0 %599
    %v603 = vmul.f32 %v593, %v598
    %v604 = vmul.f32 %v594, %v600
    %v605 = vmul.f32 %v555, %v494
    %v606 = vmul.f32 %v570, %v495
    %v607 = vadd.f32 %v603, %v605
    %v608 = vadd.f32 %v604, %v606
    %v609 = vld [vmem:[#allocation2 + $0x30] sm:$0xff]
    %v610 = vld [vmem:[#allocation2 + $0x38] sm:$0xff]
    %613 = vrot.lane.b32.xlu0 %v607, 120
    %v614 = vpop.permute.xlu0 %613
    %615 = vrot.lane.b32.xlu0 %v608, 120
    %v616 = vpop.permute.xlu0 %615
    %v617 = vsel %vm278, %v614, 0
    %v619 = vsel %vm278, %v616, 0
    %621 = vmatpush.msra.mxu0 0.0
    %622 = vmatpush.msra.mxu0 0.0
    %623 = vmatpush.msra.mxu0 0.0
    %624 = vmatpush.msra.mxu0 0.0
    %625 = vmatpush.msra.mxu0 0.0
    %626 = vmatpush.msra.mxu0 0.0
    %627 = vmatpush.msra.mxu0 0.0
    %628 = vmatpush.msra.mxu0 0.0
    %629 = vmatpush.msra.mxu0 0.0
    %630 = vmatpush.msra.mxu0 0.0
    %631 = vmatpush.msra.mxu0 0.0
    %632 = vmatpush.msra.mxu0 0.0
    %633 = vmatpush.msra.mxu0 0.0
    %634 = vmatpush.msra.mxu0 0.0
    %635 = vmatpush.msra.mxu0 0.0
    %636 = vmatpush.msra.mxu0 %v271
    %637 = vmatmul.f32.gmra.mxu0 %v617
    %v638 = vpop.f32.mrf.mxu0
    %v639 = vadd.f32 %v276, %v638
    %640 = vmatmul.f32.gmra.mxu0 %v619
    %v641 = vpop.f32.mrf.mxu0
    %v642 = vadd.f32 %v276, %v641
    %643 = vdwg.mxu0
    %v644 = vadd.f32 %v609, %v639
    %v645 = vadd.f32 %v610, %v642
    %v646 = vxor.u32 %v644, 2147483648
    %v647 = vxor.u32 %v645, 2147483648
    %v648 = vmul.f32 %v646, 1.442695
    %v649 = vpow.pop %v648
    %v650 = vmul.f32 %v647, 1.442695
    %v651 = vpow.pop %v650
    %v652 = vadd.f32 %v649, 1.0
    %v653 = vadd.f32 %v651, 1.0
    %v654 = vrcp.pop %v652
    %v655 = vmul.f32 %v652, %v654
    %v656 = vsub.f32 1.0, %v655
    %v657 = vmul.f32 %v654, %v656
    %v658 = vadd.f32 %v654, %v657
    %vm659 = vweird.f32 %v652
    %vm660 = vweird.f32 %v654
    %vm661 = vmor %vm659, %vm660
    %v662 = vsel %vm661, %v654, %v658
    %v663 = vand.u32 2147483647, %v652
    %vm664 = vcmp.eq.f32.partialorder %v663, 8.507059e+37
    %v665 = vand.u32 %v652, 2147483648
    %v666 = vor.u32 1.1754944e-38, %v665
    %v667 = vsel %vm664, %v666, %v662
    %v668 = vmul.f32 1.0, %v667
    %v669 = vrcp.pop %v653
    %v670 = vmul.f32 %v653, %v669
    %v671 = vsub.f32 1.0, %v670
    %v672 = vmul.f32 %v669, %v671
    %v673 = vadd.f32 %v669, %v672
    %vm674 = vweird.f32 %v653
    %vm675 = vweird.f32 %v669
    %vm676 = vmor %vm674, %vm675
    %v677 = vsel %vm676, %v669, %v673
    %v678 = vand.u32 2147483647, %v653
    %vm679 = vcmp.eq.f32.partialorder %v678, 8.507059e+37
    %v680 = vand.u32 %v653, 2147483648
    %v681 = vor.u32 1.1754944e-38, %v680
    %v682 = vsel %vm679, %v681, %v677
    %v683 = vmul.f32 1.0, %v682
    %686 = vrot.lane.b32.xlu0 %v639, 112
    %v687 = vpop.permute.xlu0 %686
    %688 = vrot.lane.b32.xlu0 %v642, 112
    %v689 = vpop.permute.xlu0 %688
    %v692 = vmul.f32 %v668, %v687
    %v693 = vmul.f32 %v683, %v689
    %696 = vrot.lane.b32.xlu0 %v692, 16
    %v697 = vpop.permute.xlu0 %696
    %698 = vrot.lane.b32.xlu0 %v693, 16
    %v699 = vpop.permute.xlu0 %698
    %v702 = vadd.f32 %v609, %v697
    %v703 = vadd.f32 %v610, %v699
    %v704 = vtanh.pop %v702
    %v705 = vtanh.pop %v703
    %v706 = vsub.f32 1.0, %v668
    %v707 = vsub.f32 1.0, %v683
    %710 = vrot.lane.b32.xlu0 %v704, 120
    %v711 = vpop.permute.xlu0 %710
    %712 = vrot.lane.b32.xlu0 %v705, 120
    %v713 = vpop.permute.xlu0 %712
    %v716 = vmul.f32 %v706, %v711
    %v717 = vmul.f32 %v707, %v713
    %v718 = vmul.f32 %v668, %v607
    %v719 = vmul.f32 %v683, %v608
    %v720 = vadd.f32 %v716, %v718
    %v721 = vadd.f32 %v717, %v719
    %v722 = vld [vmem:[#allocation2 + $0x40] sm:$0xff]
    %v723 = vld [vmem:[#allocation2 + $0x48] sm:$0xff]
    %726 = vrot.lane.b32.xlu0 %v720, 120
    %v727 = vpop.permute.xlu0 %726
    %728 = vrot.lane.b32.xlu0 %v721, 120
    %v729 = vpop.permute.xlu0 %728
    %v730 = vsel %vm278, %v727, 0
    %v732 = vsel %vm278, %v729, 0
    %734 = vmatpush.msra.mxu0 0.0
    %735 = vmatpush.msra.mxu0 0.0
    %736 = vmatpush.msra.mxu0 0.0
    %737 = vmatpush.msra.mxu0 0.0
    %738 = vmatpush.msra.mxu0 0.0
    %739 = vmatpush.msra.mxu0 0.0
    %740 = vmatpush.msra.mxu0 0.0
    %741 = vmatpush.msra.mxu0 0.0
    %742 = vmatpush.msra.mxu0 0.0
    %743 = vmatpush.msra.mxu0 0.0
    %744 = vmatpush.msra.mxu0 0.0
    %745 = vmatpush.msra.mxu0 0.0
    %746 = vmatpush.msra.mxu0 0.0
    %747 = vmatpush.msra.mxu0 0.0
    %748 = vmatpush.msra.mxu0 0.0
    %749 = vmatpush.msra.mxu0 %v271
    %750 = vmatmul.f32.gmra.mxu0 %v730
    %v751 = vpop.f32.mrf.mxu0
    %v752 = vadd.f32 %v276, %v751
    %753 = vmatmul.f32.gmra.mxu0 %v732
    %v754 = vpop.f32.mrf.mxu0
    %v755 = vadd.f32 %v276, %v754
    %756 = vdwg.mxu0
    %v757 = vadd.f32 %v722, %v752
    %v758 = vadd.f32 %v723, %v755
    %v759 = vxor.u32 %v757, 2147483648
    %v760 = vxor.u32 %v758, 2147483648
    %v761 = vmul.f32 %v759, 1.442695
    %v762 = vpow.pop %v761
    %v763 = vmul.f32 %v760, 1.442695
    %v764 = vpow.pop %v763
    %v765 = vadd.f32 %v762, 1.0
    %v766 = vadd.f32 %v764, 1.0
    %v767 = vrcp.pop %v765
    %v768 = vmul.f32 %v765, %v767
    %v769 = vsub.f32 1.0, %v768
    %v770 = vmul.f32 %v767, %v769
    %v771 = vadd.f32 %v767, %v770
    %vm772 = vweird.f32 %v765
    %vm773 = vweird.f32 %v767
    %vm774 = vmor %vm772, %vm773
    %v775 = vsel %vm774, %v767, %v771
    %v776 = vand.u32 2147483647, %v765
    %vm777 = vcmp.eq.f32.partialorder %v776, 8.507059e+37
    %v778 = vand.u32 %v765, 2147483648
    %v779 = vor.u32 1.1754944e-38, %v778
    %v780 = vsel %vm777, %v779, %v775
    %v781 = vmul.f32 1.0, %v780
    %v782 = vrcp.pop %v766
    %v783 = vmul.f32 %v766, %v782
    %v784 = vsub.f32 1.0, %v783
    %v785 = vmul.f32 %v782, %v784
    %v786 = vadd.f32 %v782, %v785
    %vm787 = vweird.f32 %v766
    %vm788 = vweird.f32 %v782
    %vm789 = vmor %vm787, %vm788
    %v790 = vsel %vm789, %v782, %v786
    %v791 = vand.u32 2147483647, %v766
    %vm792 = vcmp.eq.f32.partialorder %v791, 8.507059e+37
    %v793 = vand.u32 %v766, 2147483648
    %v794 = vor.u32 1.1754944e-38, %v793
    %v795 = vsel %vm792, %v794, %v790
    %v796 = vmul.f32 1.0, %v795
    %799 = vrot.lane.b32.xlu0 %v752, 112
    %v800 = vpop.permute.xlu0 %799
    %801 = vrot.lane.b32.xlu0 %v755, 112
    %v802 = vpop.permute.xlu0 %801
    %v805 = vmul.f32 %v781, %v800
    %v806 = vmul.f32 %v796, %v802
    %809 = vrot.lane.b32.xlu0 %v805, 16
    %v810 = vpop.permute.xlu0 %809
    %811 = vrot.lane.b32.xlu0 %v806, 16
    %v812 = vpop.permute.xlu0 %811
    %v815 = vadd.f32 %v722, %v810
    %v816 = vadd.f32 %v723, %v812
    %v817 = vtanh.pop %v815
    %v818 = vtanh.pop %v816
    %v819 = vsub.f32 1.0, %v781
    %v820 = vsub.f32 1.0, %v796
    %823 = vrot.lane.b32.xlu0 %v817, 120
    %v824 = vpop.permute.xlu0 %823
    %825 = vrot.lane.b32.xlu0 %v818, 120
    %v826 = vpop.permute.xlu0 %825
    %v829 = vmul.f32 %v819, %v824
    %v830 = vmul.f32 %v820, %v826
    %v831 = vmul.f32 %v781, %v720
    %v832 = vmul.f32 %v796, %v721
    %v833 = vadd.f32 %v829, %v831
    %v834 = vadd.f32 %v830, %v832
    %v835 = vld [vmem:[#allocation2 + $0x50] sm:$0xff]
    %v836 = vld [vmem:[#allocation2 + $0x58] sm:$0xff]
    %839 = vrot.lane.b32.xlu0 %v833, 120
    %v840 = vpop.permute.xlu0 %839
    %841 = vrot.lane.b32.xlu0 %v834, 120
    %v842 = vpop.permute.xlu0 %841
    %v843 = vsel %vm278, %v840, 0
    %v845 = vsel %vm278, %v842, 0
    %847 = vmatpush.msra.mxu0 0.0
    %848 = vmatpush.msra.mxu0 0.0
    %849 = vmatpush.msra.mxu0 0.0
    %850 = vmatpush.msra.mxu0 0.0
    %851 = vmatpush.msra.mxu0 0.0
    %852 = vmatpush.msra.mxu0 0.0
    %853 = vmatpush.msra.mxu0 0.0
    %854 = vmatpush.msra.mxu0 0.0
    %855 = vmatpush.msra.mxu0 0.0
    %856 = vmatpush.msra.mxu0 0.0
    %857 = vmatpush.msra.mxu0 0.0
    %858 = vmatpush.msra.mxu0 0.0
    %859 = vmatpush.msra.mxu0 0.0
    %860 = vmatpush.msra.mxu0 0.0
    %861 = vmatpush.msra.mxu0 0.0
    %862 = vmatpush.msra.mxu0 %v271
    %863 = vmatmul.f32.gmra.mxu0 %v843
    %v864 = vpop.f32.mrf.mxu0
    %v865 = vadd.f32 %v276, %v864
    %866 = vmatmul.f32.gmra.mxu0 %v845
    %v867 = vpop.f32.mrf.mxu0
    %v868 = vadd.f32 %v276, %v867
    %869 = vdwg.mxu0
    %v870 = vadd.f32 %v835, %v865
    %v871 = vadd.f32 %v836, %v868
    %v872 = vxor.u32 %v870, 2147483648
    %v873 = vxor.u32 %v871, 2147483648
    %v874 = vmul.f32 %v872, 1.442695
    %v875 = vpow.pop %v874
    %v876 = vmul.f32 %v873, 1.442695
    %v877 = vpow.pop %v876
    %v878 = vadd.f32 %v875, 1.0
    %v879 = vadd.f32 %v877, 1.0
    %v880 = vrcp.pop %v878
    %v881 = vmul.f32 %v878, %v880
    %v882 = vsub.f32 1.0, %v881
    %v883 = vmul.f32 %v880, %v882
    %v884 = vadd.f32 %v880, %v883
    %vm885 = vweird.f32 %v878
    %vm886 = vweird.f32 %v880
    %vm887 = vmor %vm885, %vm886
    %v888 = vsel %vm887, %v880, %v884
    %v889 = vand.u32 2147483647, %v878
    %vm890 = vcmp.eq.f32.partialorder %v889, 8.507059e+37
    %v891 = vand.u32 %v878, 2147483648
    %v892 = vor.u32 1.1754944e-38, %v891
    %v893 = vsel %vm890, %v892, %v888
    %v894 = vmul.f32 1.0, %v893
    %v895 = vrcp.pop %v879
    %v896 = vmul.f32 %v879, %v895
    %v897 = vsub.f32 1.0, %v896
    %v898 = vmul.f32 %v895, %v897
    %v899 = vadd.f32 %v895, %v898
    %vm900 = vweird.f32 %v879
    %vm901 = vweird.f32 %v895
    %vm902 = vmor %vm900, %vm901
    %v903 = vsel %vm902, %v895, %v899
    %v904 = vand.u32 2147483647, %v879
    %vm905 = vcmp.eq.f32.partialorder %v904, 8.507059e+37
    %v906 = vand.u32 %v879, 2147483648
    %v907 = vor.u32 1.1754944e-38, %v906
    %v908 = vsel %vm905, %v907, %v903
    %v909 = vmul.f32 1.0, %v908
    %912 = vrot.lane.b32.xlu0 %v865, 112
    %v913 = vpop.permute.xlu0 %912
    %914 = vrot.lane.b32.xlu0 %v868, 112
    %v915 = vpop.permute.xlu0 %914
    %v918 = vmul.f32 %v894, %v913
    %v919 = vmul.f32 %v909, %v915
    %922 = vrot.lane.b32.xlu0 %v918, 16
    %v923 = vpop.permute.xlu0 %922
    %924 = vrot.lane.b32.xlu0 %v919, 16
    %v925 = vpop.permute.xlu0 %924
    %v928 = vadd.f32 %v835, %v923
    %v929 = vadd.f32 %v836, %v925
    %v930 = vtanh.pop %v928
    %v931 = vtanh.pop %v929
    %v932 = vsub.f32 1.0, %v894
    %v933 = vsub.f32 1.0, %v909
    %936 = vrot.lane.b32.xlu0 %v930, 120
    %v937 = vpop.permute.xlu0 %936
    %938 = vrot.lane.b32.xlu0 %v931, 120
    %v939 = vpop.permute.xlu0 %938
    %v942 = vmul.f32 %v932, %v937
    %v943 = vmul.f32 %v933, %v939
    %v944 = vmul.f32 %v894, %v833
    %v945 = vmul.f32 %v909, %v834
    %v946 = vadd.f32 %v942, %v944
    %v947 = vadd.f32 %v943, %v945
    %v948 = vld [vmem:[#allocation2 + $0x60] sm:$0xff]
    %v949 = vld [vmem:[#allocation2 + $0x68] sm:$0xff]
    %952 = vrot.lane.b32.xlu0 %v946, 120
    %v953 = vpop.permute.xlu0 %952
    %954 = vrot.lane.b32.xlu0 %v947, 120
    %v955 = vpop.permute.xlu0 %954
    %v956 = vsel %vm278, %v953, 0
    %v958 = vsel %vm278, %v955, 0
    %960 = vmatpush.msra.mxu0 0.0
    %961 = vmatpush.msra.mxu0 0.0
    %962 = vmatpush.msra.mxu0 0.0
    %963 = vmatpush.msra.mxu0 0.0
    %964 = vmatpush.msra.mxu0 0.0
    %965 = vmatpush.msra.mxu0 0.0
    %966 = vmatpush.msra.mxu0 0.0
    %967 = vmatpush.msra.mxu0 0.0
    %968 = vmatpush.msra.mxu0 0.0
    %969 = vmatpush.msra.mxu0 0.0
    %970 = vmatpush.msra.mxu0 0.0
    %971 = vmatpush.msra.mxu0 0.0
    %972 = vmatpush.msra.mxu0 0.0
    %973 = vmatpush.msra.mxu0 0.0
    %974 = vmatpush.msra.mxu0 0.0
    %975 = vmatpush.msra.mxu0 %v271
    %976 = vmatmul.f32.gmra.mxu0 %v956
    %v977 = vpop.f32.mrf.mxu0
    %v978 = vadd.f32 %v276, %v977
    %979 = vmatmul.f32.gmra.mxu0 %v958
    %v980 = vpop.f32.mrf.mxu0
    %v981 = vadd.f32 %v276, %v980
    %982 = vdwg.mxu0
    %v983 = vadd.f32 %v948, %v978
    %v984 = vadd.f32 %v949, %v981
    %v985 = vxor.u32 %v983, 2147483648
    %v986 = vxor.u32 %v984, 2147483648
    %v987 = vmul.f32 %v985, 1.442695
    %v988 = vpow.pop %v987
    %v989 = vmul.f32 %v986, 1.442695
    %v990 = vpow.pop %v989
    %v991 = vadd.f32 %v988, 1.0
    %v992 = vadd.f32 %v990, 1.0
    %v993 = vrcp.pop %v991
    %v994 = vmul.f32 %v991, %v993
    %v995 = vsub.f32 1.0, %v994
    %v996 = vmul.f32 %v993, %v995
    %v997 = vadd.f32 %v993, %v996
    %vm998 = vweird.f32 %v991
    %vm999 = vweird.f32 %v993
    %vm1000 = vmor %vm998, %vm999
    %v1001 = vsel %vm1000, %v993, %v997
    %v1002 = vand.u32 2147483647, %v991
    %vm1003 = vcmp.eq.f32.partialorder %v1002, 8.507059e+37
    %v1004 = vand.u32 %v991, 2147483648
    %v1005 = vor.u32 1.1754944e-38, %v1004
    %v1006 = vsel %vm1003, %v1005, %v1001
    %v1007 = vmul.f32 1.0, %v1006
    %v1008 = vrcp.pop %v992
    %v1009 = vmul.f32 %v992, %v1008
    %v1010 = vsub.f32 1.0, %v1009
    %v1011 = vmul.f32 %v1008, %v1010
    %v1012 = vadd.f32 %v1008, %v1011
    %vm1013 = vweird.f32 %v992
    %vm1014 = vweird.f32 %v1008
    %vm1015 = vmor %vm1013, %vm1014
    %v1016 = vsel %vm1015, %v1008, %v1012
    %v1017 = vand.u32 2147483647, %v992
    %vm1018 = vcmp.eq.f32.partialorder %v1017, 8.507059e+37
    %v1019 = vand.u32 %v992, 2147483648
    %v1020 = vor.u32 1.1754944e-38, %v1019
    %v1021 = vsel %vm1018, %v1020, %v1016
    %v1022 = vmul.f32 1.0, %v1021
    %1025 = vrot.lane.b32.xlu0 %v978, 112
    %v1026 = vpop.permute.xlu0 %1025
    %1027 = vrot.lane.b32.xlu0 %v981, 112
    %v1028 = vpop.permute.xlu0 %1027
    %v1031 = vmul.f32 %v1007, %v1026
    %v1032 = vmul.f32 %v1022, %v1028
    %1035 = vrot.lane.b32.xlu0 %v1031, 16
    %v1036 = vpop.permute.xlu0 %1035
    %1037 = vrot.lane.b32.xlu0 %v1032, 16
    %v1038 = vpop.permute.xlu0 %1037
    %v1041 = vadd.f32 %v948, %v1036
    %v1042 = vadd.f32 %v949, %v1038
    %v1043 = vtanh.pop %v1041
    %v1044 = vtanh.pop %v1042
    %v1045 = vsub.f32 1.0, %v1007
    %v1046 = vsub.f32 1.0, %v1022
    %1049 = vrot.lane.b32.xlu0 %v1043, 120
    %v1050 = vpop.permute.xlu0 %1049
    %1051 = vrot.lane.b32.xlu0 %v1044, 120
    %v1052 = vpop.permute.xlu0 %1051
    %v1055 = vmul.f32 %v1045, %v1050
    %v1056 = vmul.f32 %v1046, %v1052
    %v1057 = vmul.f32 %v1007, %v946
    %v1058 = vmul.f32 %v1022, %v947
    %v1059 = vadd.f32 %v1055, %v1057
    %v1060 = vadd.f32 %v1056, %v1058
    %v1061 = vld [vmem:[#allocation2 + $0x70] sm:$0xff]
    %v1062 = vld [vmem:[#allocation2 + $0x78] sm:$0xff]
    %1065 = vrot.lane.b32.xlu0 %v1059, 120
    %v1066 = vpop.permute.xlu0 %1065
    %1067 = vrot.lane.b32.xlu0 %v1060, 120
    %v1068 = vpop.permute.xlu0 %1067
    %v1069 = vsel %vm278, %v1066, 0
    %v1071 = vsel %vm278, %v1068, 0
    %1073 = vmatpush.msra.mxu0 0.0
    %1074 = vmatpush.msra.mxu0 0.0
    %1075 = vmatpush.msra.mxu0 0.0
    %1076 = vmatpush.msra.mxu0 0.0
    %1077 = vmatpush.msra.mxu0 0.0
    %1078 = vmatpush.msra.mxu0 0.0
    %1079 = vmatpush.msra.mxu0 0.0
    %1080 = vmatpush.msra.mxu0 0.0
    %1081 = vmatpush.msra.mxu0 0.0
    %1082 = vmatpush.msra.mxu0 0.0
    %1083 = vmatpush.msra.mxu0 0.0
    %1084 = vmatpush.msra.mxu0 0.0
    %1085 = vmatpush.msra.mxu0 0.0
    %1086 = vmatpush.msra.mxu0 0.0
    %1087 = vmatpush.msra.mxu0 0.0
    %1088 = vmatpush.msra.mxu0 %v271
    %1089 = vmatmul.f32.gmra.mxu0 %v1069
    %v1090 = vpop.f32.mrf.mxu0
    %v1091 = vadd.f32 %v276, %v1090
    %1092 = vmatmul.f32.gmra.mxu0 %v1071
    %v1093 = vpop.f32.mrf.mxu0
    %v1094 = vadd.f32 %v276, %v1093
    %1095 = vdwg.mxu0
    %v1096 = vadd.f32 %v1061, %v1091
    %v1097 = vadd.f32 %v1062, %v1094
    %v1098 = vxor.u32 %v1096, 2147483648
    %v1099 = vxor.u32 %v1097, 2147483648
    %v1100 = vmul.f32 %v1098, 1.442695
    %v1101 = vpow.pop %v1100
    %v1102 = vmul.f32 %v1099, 1.442695
    %v1103 = vpow.pop %v1102
    %v1104 = vadd.f32 %v1101, 1.0
    %v1105 = vadd.f32 %v1103, 1.0
    %v1106 = vrcp.pop %v1104
    %v1107 = vmul.f32 %v1104, %v1106
    %v1108 = vsub.f32 1.0, %v1107
    %v1109 = vmul.f32 %v1106, %v1108
    %v1110 = vadd.f32 %v1106, %v1109
    %vm1111 = vweird.f32 %v1104
    %vm1112 = vweird.f32 %v1106
    %vm1113 = vmor %vm1111, %vm1112
    %v1114 = vsel %vm1113, %v1106, %v1110
    %v1115 = vand.u32 2147483647, %v1104
    %vm1116 = vcmp.eq.f32.partialorder %v1115, 8.507059e+37
    %v1117 = vand.u32 %v1104, 2147483648
    %v1118 = vor.u32 1.1754944e-38, %v1117
    %v1119 = vsel %vm1116, %v1118, %v1114
    %v1120 = vmul.f32 1.0, %v1119
    %v1121 = vrcp.pop %v1105
    %v1122 = vmul.f32 %v1105, %v1121
    %v1123 = vsub.f32 1.0, %v1122
    %v1124 = vmul.f32 %v1121, %v1123
    %v1125 = vadd.f32 %v1121, %v1124
    %vm1126 = vweird.f32 %v1105
    %vm1127 = vweird.f32 %v1121
    %vm1128 = vmor %vm1126, %vm1127
    %v1129 = vsel %vm1128, %v1121, %v1125
    %v1130 = vand.u32 2147483647, %v1105
    %vm1131 = vcmp.eq.f32.partialorder %v1130, 8.507059e+37
    %v1132 = vand.u32 %v1105, 2147483648
    %v1133 = vor.u32 1.1754944e-38, %v1132
    %v1134 = vsel %vm1131, %v1133, %v1129
    %v1135 = vmul.f32 1.0, %v1134
    %1138 = vrot.lane.b32.xlu0 %v1091, 112
    %v1139 = vpop.permute.xlu0 %1138
    %1140 = vrot.lane.b32.xlu0 %v1094, 112
    %v1141 = vpop.permute.xlu0 %1140
    %v1144 = vmul.f32 %v1120, %v1139
    %v1145 = vmul.f32 %v1135, %v1141
    %1148 = vrot.lane.b32.xlu0 %v1144, 16
    %v1149 = vpop.permute.xlu0 %1148
    %1150 = vrot.lane.b32.xlu0 %v1145, 16
    %v1151 = vpop.permute.xlu0 %1150
    %v1154 = vadd.f32 %v1061, %v1149
    %v1155 = vadd.f32 %v1062, %v1151
    %v1156 = vtanh.pop %v1154
    %v1157 = vtanh.pop %v1155
    %v1158 = vsub.f32 1.0, %v1120
    %v1159 = vsub.f32 1.0, %v1135
    %1162 = vrot.lane.b32.xlu0 %v1156, 120
    %v1163 = vpop.permute.xlu0 %1162
    %1164 = vrot.lane.b32.xlu0 %v1157, 120
    %v1165 = vpop.permute.xlu0 %1164
    %v1168 = vmul.f32 %v1158, %v1163
    %v1169 = vmul.f32 %v1159, %v1165
    %v1170 = vmul.f32 %v1120, %v1059
    %v1171 = vmul.f32 %v1135, %v1060
    %v1172 = vadd.f32 %v1168, %v1170
    %v1173 = vadd.f32 %v1169, %v1171
    %v1174 = vld [vmem:[%s5] sm:$0xff]
    %v1175 = vld [vmem:[%s6] sm:$0x1]
    %v1177 = vperm.slane %v1175, 0
    %1181 = vrot.lane.b32.xlu0 %v1172, 120
    %v1182 = vpop.permute.xlu0 %1181
    %1183 = vrot.lane.b32.xlu0 %v1173, 120
    %v1184 = vpop.permute.xlu0 %1183
    %v1185 = vsel %vm278, %v1182, 0
    %v1187 = vsel %vm278, %v1184, 0
    %1189 = vmatpush.msra.mxu0 0.0
    %1190 = vmatpush.msra.mxu0 0.0
    %1191 = vmatpush.msra.mxu0 0.0
    %1192 = vmatpush.msra.mxu0 0.0
    %1193 = vmatpush.msra.mxu0 0.0
    %1194 = vmatpush.msra.mxu0 0.0
    %1195 = vmatpush.msra.mxu0 0.0
    %1196 = vmatpush.msra.mxu0 0.0
    %1197 = vmatpush.msra.mxu0 0.0
    %1198 = vmatpush.msra.mxu0 0.0
    %1199 = vmatpush.msra.mxu0 0.0
    %1200 = vmatpush.msra.mxu0 0.0
    %1201 = vmatpush.msra.mxu0 0.0
    %1202 = vmatpush.msra.mxu0 0.0
    %1203 = vmatpush.msra.mxu0 0.0
    %1204 = vmatpush.msra.mxu0 %v1174
    %1205 = vmatmul.f32.gmra.mxu0 %v1185
    %v1206 = vpop.f32.mrf.mxu0
    %v1207 = vadd.f32 %v1177, %v1206
    %1208 = vmatmul.f32.gmra.mxu0 %v1187
    %v1209 = vpop.f32.mrf.mxu0
    %v1210 = vadd.f32 %v1177, %v1209
    %1211 = vdwg.mxu0
    %1212 = vst.msk [vmem:[#allocation3] sm:$0xff] %vm83, %v1207
    %1213 = vst.msk [vmem:[#allocation3 + $0x8] sm:$0xff] %vm83, %v1210
    // Predicated region
    $region50: #{encoder_forward.1} parent=1 // pred_check
      _
    $region51: #{encoder_forward.1} parent=1 // pred_check_branch
      %1215 = sbr.rel (0) target = $region53
    $region52: #{encoder_forward.1} parent=1 // pred_region
      %1217 = vsyncadd [#allocation4], 0
      %s1218 = sshll.u32 [#allocation3], 4
      %s1219 = int_to_ptr.vmem [resolvable:$true] %s1218
      %s1220 = sshll.u32 %s12, 4
      %s1221 = int_to_ptr.hbm [resolvable:$true] %s1220
      %1226 = dma.vmem_to_hbm [thread:$0]  %s1219, 256, %s1221, [#allocation4], 128, 128, 8
    $region53: #{encoder_forward.1} parent=1 // pred_fallthru
      _
    // Predicated region
    $region54: #{encoder_forward.1} parent=1 // pred_check
      _
    $region55: #{encoder_forward.1} parent=1 // pred_check_branch
      %1228 = sbr.rel (0) target = $region57
    $region56: #{encoder_forward.1} parent=1 // pred_region
      %1230 = vsyncadd [#allocation6], 0
      %s1231 = sshll.u32 [#allocation5], 4
      %s1232 = int_to_ptr.vmem [resolvable:$true] %s1231
      %s1233 = sshll.u32 %s13, 4
      %s1234 = int_to_ptr.hbm [resolvable:$true] %s1233
      %1239 = dma.vmem_to_hbm [thread:$0]  %s1232, 256, %s1234, [#allocation6], 128, 128, 8
    $region57: #{encoder_forward.1} parent=1 // pred_fallthru
      _
    // Predicated region
    $region58: #{encoder_forward.1} parent=1 // pred_check
      _
    $region59: #{encoder_forward.1} parent=1 // pred_check_branch
      %1241 = sbr.rel (0) target = $region61
    $region60: #{encoder_forward.1} parent=1 // pred_region
      %1243 = dma.done [#allocation4], 256
    $region61: #{encoder_forward.1} parent=1 // pred_fallthru
      _
    // Predicated region
    $region62: #{encoder_forward.1} parent=1 // pred_check
      _
    $region63: #{encoder_forward.1} parent=1 // pred_check_branch
      %1245 = sbr.rel (0) target = $region65
    $region64: #{encoder_forward.1} parent=1 // pred_region
      %1247 = dma.done [#allocation6], 256
    $region65: #{encoder_forward.1} parent=1 // pred_fallthru
      _
    %1248 = vsyncpa [#allocation4], 1
    %1249 = vsyncpa [#allocation6], 1

</llo_original>
